<compile_context>
chip_gen: v7x
topology: tpu7x:2x2x1
jax: 0.10.0
libtpu: 0.0.40
codegen_flags: <defaults>
</compile_context>

<pallas_src>
import functools
import types

import numpy as np
import jax
import jax.numpy as jnp
from jax.experimental import pallas as pl
from jax.experimental.pallas import tpu as pltpu


_ROW_BLK = 128          # rows of the flattened spatial dim per MXU tile
_MARGIN = 8             # spare (zero) rows above/below the padded conv buffer


def _round_up(x, m):
    return (x + m - 1) // m * m


def _wrow(w):
    return _round_up(w + 2, 8)


def _row_blocks(total):
    out, r0 = [], 0
    while r0 < total:
        out.append((r0, min(_ROW_BLK, total - r0)))
        r0 += _ROW_BLK
    return tuple(out)


@functools.lru_cache(maxsize=None)
def _col_mask_np(h, w):
    wrow = _wrow(w)
    col = np.arange(h * wrow) % wrow
    return ((col >= 1) & (col <= w)).astype(np.float32).reshape(h * wrow, 1)


def _mask(h, w):
    return jnp.asarray(_col_mask_np(h, w))


# ----------------------------------------------------------------------------
# padded-flat layout helpers (XLA side, only at graph boundaries)
# ----------------------------------------------------------------------------
def nhwc_to_flat(x):
    n, h, w, c = x.shape
    wrow = _wrow(w)
    x = jnp.pad(x, ((0, 0), (0, 0), (1, wrow - w - 1), (0, 0)))
    return x.reshape(n, h * wrow, c)


def flat_to_nhwc(x, h, w):
    n, _, c = x.shape
    wrow = _wrow(w)
    return x.reshape(n, h, wrow, c)[:, :, 1:w + 1, :]


def pixel_shuffle_nhwc(x, r):
    n, h, w, crr = x.shape
    c = crr // (r * r)
    x = x.reshape(n, h, w, c, r, r)
    x = jnp.transpose(x, (0, 1, 4, 2, 5, 3))
    return x.reshape(n, h * r, w * r, c)


# ----------------------------------------------------------------------------
# Kernels
# ----------------------------------------------------------------------------
def _conv3x3_kernel(x_ref, mask_ref, w_ref, b_ref, o_ref, buf_ref,
                    *, H, W, Wrow, Cin, relu):
    # x_ref: (1, total, Cin) f32 padded-flat (pad columns are zero)
    # w_ref: (3, 3*Cin, Cout) bf16 (per-dy weights, dx folded into K)
    # b_ref: (1, Cout) f32; o_ref: (1, total, Cout) f32 padded-flat
    # buf_ref: VMEM ((H+2)*Wrow + 2*_MARGIN, 3*Cin) bf16
    total = H * Wrow
    interior = _MARGIN + Wrow                 # buffer row of flat pixel 0
    cout = o_ref.shape[-1]
    nbuf = buf_ref.shape[0]

    # Zero only the halo bands (incl. the one boundary row of each shifted
    # copy that the staging below does not rewrite); the interior is fully
    # rewritten every step, so no full memset is needed.
    buf_ref[0:interior + 1, :] = jnp.zeros((interior + 1, 3 * Cin), buf_ref.dtype)
    buf_ref[interior + total - 1:nbuf, :] = jnp.zeros(
        (nbuf - (interior + total - 1), 3 * Cin), buf_ref.dtype)

    # Stage three row-shifted copies: channel block dx holds x shifted by dx-1.
    xb = x_ref[0].astype(buf_ref.dtype)
    for dx in range(3):
        dst = interior + 1 - dx
        buf_ref[dst:dst + total, dx * Cin:(dx + 1) * Cin] = xb

    bias_tile = jnp.broadcast_to(b_ref[...], (_ROW_BLK, cout))   # hoisted
    for r0, blk in _row_blocks(total):
        acc = bias_tile[:blk, :]
        for dy in range(3):
            s = _MARGIN + dy * Wrow + r0                         # 8-row aligned
            acc = acc + jnp.dot(buf_ref[s:s + blk, :], w_ref[dy],
                                preferred_element_type=jnp.float32)
        if relu:
            acc = jnp.maximum(acc, 0.0)
        # keep the pad-column invariant of the canonical layout
        o_ref[0, r0:r0 + blk, :] = acc * mask_ref[r0:r0 + blk, :]


def _rdb_chain_kernel(x_ref, mask_ref, wc_ref, bc_ref, wl_ref, bl_ref,
                      wg_ref, bg_ref, gff_ref, t5_ref, t11_ref,
                      buf_ref, xcur_ref, gacc_ref,
                      *, H, W, Wrow, G0, G, C, trunk_slot, k_slices,
                      tap_a, tap_b):
    # Fused residual-dense-block chain + GFF 1x1; one RDB per grid step d.
    # buf_ref:  VMEM wide bf16 buffer, channels = 3 shifted copies per slot
    # xcur_ref: VMEM (total, G0) f32 trunk carried across d
    # gacc_ref: VMEM (total, G0) f32 running GFF-1x1 accumulator
    total = H * Wrow
    interior = _MARGIN + Wrow
    d = pl.program_id(1)
    n_d = pl.num_programs(1)

    @pl.when(d == 0)
    def _init():
        # One full clear per image: halo rows / never-written pad channels must
        # read as zero, and a conv's own (zero-weighted) output slot must hold
        # finite data before its first write.
        buf_ref[...] = jnp.zeros_like(buf_ref)
        xcur_ref[...] = x_ref[0]
        gacc_ref[...] = jnp.broadcast_to(bg_ref[...], (total, G0))

    # Stage the trunk (three row-shifted bf16 copies) into its channel slot.
    xb = xcur_ref[...].astype(buf_ref.dtype)
    for dx in range(3):
        dst = interior + 1 - dx
        off = dx * trunk_slot
        buf_ref[dst:dst + total, off:off + G0] = xb

    blocks = _row_blocks(total)

    for c in range(C):                        # RDB_Conv: 3x3 + ReLU, "concat"
        kw = k_slices[c]                      # 128-rounded valid-K prefix
        lo = 3 * (trunk_slot + c * G)         # lane-aligned output slot
        bias_tile = jnp.broadcast_to(bc_ref[0, c], (_ROW_BLK, G))
        for r0, blk in blocks:
            acc = bias_tile[:blk, :]
            for dy in range(3):
                s = _MARGIN + dy * Wrow + r0
                acc = acc + jnp.dot(buf_ref[s:s + blk, 0:kw],
                                    wc_ref[0, c, dy, 0:kw, :],
                                    preferred_element_type=jnp.float32)
            out = jnp.maximum(acc, 0.0) * mask_ref[r0:r0 + blk, :]
            outb = out.astype(buf_ref.dtype)
            for dx in range(3):               # torch.cat == channel-slot store
                dst = interior + r0 + 1 - dx
                buf_ref[dst:dst + blk, lo + dx * G:lo + (dx + 1) * G] = outb

    # LFF (1x1) + local residual + on-the-fly GFF-1x1 accumulation.
    bl_tile = jnp.broadcast_to(bl_ref[0], (_ROW_BLK, G0))
    wg = wg_ref[0]
    for r0, blk in blocks:
        patch = buf_ref[interior + r0:interior + r0 + blk, :]
        lff = bl_tile[:blk, :] + jnp.dot(patch, wl_ref[0],
                                         preferred_element_type=jnp.float32)
        new_x = (lff + xcur_ref[r0:r0 + blk, :]) * mask_ref[r0:r0 + blk, :]
        xcur_ref[r0:r0 + blk, :] = new_x
        gacc_ref[r0:r0 + blk, :] += jnp.dot(new_x.astype(wg.dtype), wg,
                                            preferred_element_type=jnp.float32)

    @pl.when(d == tap_a)
    def _tap_a():
        t5_ref[0] = xcur_ref[...]

    @pl.when(d == tap_b)
    def _tap_b():
        t11_ref[0] = xcur_ref[...]

    @pl.when(d == n_d - 1)
    def _emit_gff():
        gff_ref[0] = gacc_ref[...] * mask_ref[...]


# ----------------------------------------------------------------------------
# pallas_call builders (cached per shape signature) + thin wrappers
# ----------------------------------------------------------------------------
@functools.lru_cache(maxsize=None)
def _build_conv3x3(n, h, w, cin, cout, relu):
    wrow = _wrow(w)
    total = h * wrow
    nbuf = (h + 2) * wrow + 2 * _MARGIN
    kernel = functools.partial(_conv3x3_kernel, H=h, W=w, Wrow=wrow,
                               Cin=cin, relu=relu)
    return pl.pallas_call(
        kernel,
        out_shape=jax.ShapeDtypeStruct((n, total, cout), jnp.float32),
        grid=(n,),
        in_specs=[
            pl.BlockSpec((1, total, cin), lambda i: (i, 0, 0)),
            pl.BlockSpec((total, 1), lambda i: (0, 0)),
            pl.BlockSpec((3, 3 * cin, cout), lambda i: (0, 0, 0)),
            pl.BlockSpec((1, cout), lambda i: (0, 0)),
        ],
        out_specs=pl.BlockSpec((1, total, cout), lambda i: (i, 0, 0)),
        scratch_shapes=[pltpu.VMEM((nbuf, 3 * cin), jnp.bfloat16)],
        compiler_params=pltpu.CompilerParams(dimension_semantics=("parallel",)),
        cost_estimate=pl.CostEstimate(
            flops=2 * n * total * 9 * cin * cout, transcendentals=0,
            bytes_accessed=4 * n * total * (cin + cout) + 2 * 9 * cin * cout),
    )


def conv3x3_flat(x_flat, w_wide, b, mask, *, H, W, relu=False):
    """'same' 3x3 conv, padded-flat in / padded-flat out."""
    n, _, cin = x_flat.shape
    cout = w_wide.shape[-1]
    return _build_conv3x3(n, H, W, cin, cout, relu)(x_flat, mask, w_wide, b)


@functools.lru_cache(maxsize=None)
def _build_rdb_chain(n, d, h, w, g0, g, c, trunk_slot):
    wrow = _wrow(w)
    total = h * wrow
    kw_total = 3 * (trunk_slot + c * g)
    nbuf = (h + 2) * wrow + 2 * _MARGIN
    k_slices = tuple(min(_round_up(3 * (trunk_slot + i * g), 128), kw_total)
                     for i in range(c))
    kernel = functools.partial(
        _rdb_chain_kernel, H=h, W=w, Wrow=wrow, G0=g0, G=g, C=c,
        trunk_slot=trunk_slot, k_slices=k_slices, tap_a=5, tap_b=11)
    conv_flops = sum(2 * 3 * k * g for k in k_slices)
    flops = n * d * total * (conv_flops + 2 * kw_total * g0 + 2 * g0 * g0)
    bytes_accessed = (4 * n * total * g0
                      + n * d * 2 * (c * 3 * kw_total * g + kw_total * g0)
                      + 3 * 4 * n * total * g0)
    out_sd = jax.ShapeDtypeStruct((n, total, g0), jnp.float32)
    return pl.pallas_call(
        kernel,
        out_shape=(out_sd, out_sd, out_sd),
        grid=(n, d),
        in_specs=[
            pl.BlockSpec((1, total, g0), lambda i, j: (i, 0, 0)),
            pl.BlockSpec((total, 1), lambda i, j: (0, 0)),
            pl.BlockSpec((1, c, 3, kw_total, g), lambda i, j: (j, 0, 0, 0, 0)),
            pl.BlockSpec((1, c, 1, g), lambda i, j: (j, 0, 0, 0)),
            pl.BlockSpec((1, kw_total, g0), lambda i, j: (j, 0, 0)),
            pl.BlockSpec((1, 1, g0), lambda i, j: (j, 0, 0)),
            pl.BlockSpec((1, g0, g0), lambda i, j: (j, 0, 0)),
            pl.BlockSpec((1, g0), lambda i, j: (0, 0)),
        ],
        out_specs=(pl.BlockSpec((1, total, g0), lambda i, j: (i, 0, 0)),
                   pl.BlockSpec((1, total, g0), lambda i, j: (i, 0, 0)),
                   pl.BlockSpec((1, total, g0), lambda i, j: (i, 0, 0))),
        scratch_shapes=[pltpu.VMEM((nbuf, kw_total), jnp.bfloat16),
                        pltpu.VMEM((total, g0), jnp.float32),
                        pltpu.VMEM((total, g0), jnp.float32)],
        compiler_params=pltpu.CompilerParams(
            dimension_semantics=("parallel", "arbitrary")),
        cost_estimate=pl.CostEstimate(flops=flops, transcendentals=0,
                                      bytes_accessed=bytes_accessed),
    )


def rdb_chain_gff(x_flat, mask, wc, bc, wl, bl, wg, bg, *, H, W):
    """All D RDBs + fused GFF 1x1.  Returns (gff_out, tap_d5, tap_d11)."""
    n, _, g0 = x_flat.shape
    d, c, _, kw_total, g = wc.shape
    trunk_slot = kw_total // 3 - c * g
    f = _build_rdb_chain(n, d, H, W, g0, g, c, trunk_slot)
    return f(x_flat, mask, wc, bc, wl, bl, wg, bg)


# ----------------------------------------------------------------------------
# Weight packing (synthetic params, PyTorch-like init)
# ----------------------------------------------------------------------------
def _conv_param(key, cin, cout, k):
    wk, bk = jax.random.split(key)
    bound = 1.0 / float(np.sqrt(cin * k * k))
    w = jax.random.uniform(wk, (k, k, cin, cout), jnp.float32, -bound, bound)
    b = jax.random.uniform(bk, (cout,), jnp.float32, -bound, bound)
    return np.asarray(w), np.asarray(b)


def _pack_w3_wide(w, slot_widths, slot_valid):
    """(3,3,Cin,Cout) -> (3, 3*sum(slot_widths), Cout) for the wide buffer."""
    kw = 3 * sum(slot_widths)
    out = np.zeros((3, kw, w.shape[-1]), np.float32)
    wide = 0
    base = 0
    for sw, sv in zip(slot_widths, slot_valid):
        for dx in range(3):
            for ch in range(sw):
                if ch < sv:
                    out[:, wide, :] = w[:, dx, base + ch, :]
                wide += 1
        base += sv
    return out


def _pack_w1_wide(w, slot_widths, slot_valid):
    """(Cin, Cout) 1x1 weight -> rows at the unshifted (dx==1) positions."""
    kw = 3 * sum(slot_widths)
    out = np.zeros((kw, w.shape[-1]), np.float32)
    wide = 0
    base = 0
    for sw, sv in zip(slot_widths, slot_valid):
        for dx in range(3):
            for ch in range(sw):
                if dx == 1 and ch < sv:
                    out[wide, :] = w[base + ch, :]
                wide += 1
        base += sv
    return out


def _prep3(w, b):
    cin = w.shape[2]
    ww = _pack_w3_wide(w, [cin], [cin])
    return jnp.asarray(ww, jnp.bfloat16), jnp.asarray(b.reshape(1, -1), jnp.float32)


_CONFIGS = {'A': (20, 6, 32), 'B': (16, 8, 64)}


class RDNPallas:
    def __init__(self, args, key):
        self.args = args
        self.r = args.scale[0]
        self.G0 = args.G0
        self.n_colors = args.n_colors
        D, C, G = _CONFIGS[args.RDNconfig]
        self.D, self.C, self.G = D, C, G
        assert args.RDNkSize == 3
        G0 = self.G0
        self.trunk_slot = _round_up(G0, G)        # lane-aligned channel slots
        self.sfe1_cin = _round_up(args.n_colors, 16)

        keys = iter(jax.random.split(key, 4 + D * (C + 1) + 8))
        self.params = {}
        self.raw = {}

        w, b = _conv_param(next(keys), args.n_colors, G0, 3)
        self.raw['sfe1'] = (w, b)
        wpad = np.pad(w, ((0, 0), (0, 0), (0, self.sfe1_cin - args.n_colors), (0, 0)))
        self.params['sfe1'] = _prep3(wpad, b)

        w, b = _conv_param(next(keys), G0, G0, 3)
        self.raw['sfe2'] = (w, b)
        self.params['sfe2'] = _prep3(w, b)

        ts = self.trunk_slot
        slot_widths = [ts] + [G] * C
        kw_total = 3 * (ts + C * G)
        wc = np.zeros((D, C, 3, kw_total, G), np.float32)
        bc = np.zeros((D, C, 1, G), np.float32)
        wl = np.zeros((D, kw_total, G0), np.float32)
        bl = np.zeros((D, 1, G0), np.float32)
        self.raw['rdbs'] = []
        for d in range(D):
            convs = []
            for c in range(C):
                cin_c = G0 + c * G
                ww, bb = _conv_param(next(keys), cin_c, G, 3)
                convs.append((ww, bb))
                wc[d, c] = _pack_w3_wide(ww, slot_widths,
                                         [G0] + [G] * c + [0] * (C - c))
                bc[d, c, 0] = bb
            ww, bb = _conv_param(next(keys), G0 + C * G, G0, 1)
            wl[d] = _pack_w1_wide(ww.reshape(G0 + C * G, G0), slot_widths,
                                  [G0] + [G] * C)
            bl[d, 0] = bb
            self.raw['rdbs'].append((convs, (ww, bb)))
        self.params['rdbs'] = (jnp.asarray(wc, jnp.bfloat16), jnp.asarray(bc),
                               jnp.asarray(wl, jnp.bfloat16), jnp.asarray(bl))

        # GFF 1x1 is fused into the chain kernel (split into per-block slices).
        wg_raw, bg_raw = _conv_param(next(keys), D * G0, G0, 1)
        self.raw['gff1'] = (wg_raw, bg_raw)
        wg = wg_raw.reshape(D * G0, G0).reshape(D, G0, G0)
        self.params['gff1'] = (jnp.asarray(wg, jnp.bfloat16),
                               jnp.asarray(bg_raw.reshape(1, G0), jnp.float32))

        w, b = _conv_param(next(keys), G0, G0, 3)
        self.raw['gff2'] = (w, b)
        self.params['gff2'] = _prep3(w, b)

        r = self.r
        ups_raw = []
        if r in (2, 3):
            ups_raw.append(_conv_param(next(keys), G0, G * r * r, 3))
            ups_raw.append(_conv_param(next(keys), G, args.n_colors, 3))
        elif r == 4:
            ups_raw.append(_conv_param(next(keys), G0, G * 4, 3))
            ups_raw.append(_conv_param(next(keys), G, G * 4, 3))
            ups_raw.append(_conv_param(next(keys), G, args.n_colors, 3))
        else:
            raise ValueError('scale must be 2 or 3 or 4.')
        self.raw['up'] = ups_raw
        packed = []
        for idx, (w, b) in enumerate(ups_raw):
            if idx == len(ups_raw) - 1:
                # de-mask the narrowest store: pad 3 output channels up to 8,
                # the wrapper slices the real channels back out.
                cpad = _round_up(args.n_colors, 8)
                w = np.pad(w, ((0, 0), (0, 0), (0, 0), (0, cpad - args.n_colors)))
                b = np.pad(b, ((0, cpad - args.n_colors),))
            packed.append(_prep3(w, b))
        self.params['up'] = packed

        # TODO(synk): fc_layers / AdaptiveAvgPool1d from _make_fc are never used
        # in RDN.forward(), so they are intentionally not implemented here.

        self._jit_forward = jax.jit(self._forward_impl)

    # ---------------------------------------------------------------- forward
    def _forward_impl(self, params, x_nchw):
        h, w = x_nchw.shape[2], x_nchw.shape[3]
        x = jnp.transpose(x_nchw, (0, 2, 3, 1)).astype(jnp.float32)   # -> NHWC
        if x.shape[-1] < self.sfe1_cin:
            x = jnp.pad(x, ((0, 0), (0, 0), (0, 0),
                            (0, self.sfe1_cin - x.shape[-1])))
        xf = nhwc_to_flat(x)
        mask = _mask(h, w)

        f1 = conv3x3_flat(xf, *params['sfe1'], mask, H=h, W=w)
        x0 = conv3x3_flat(f1, *params['sfe2'], mask, H=h, W=w)
        feature_maps = [flat_to_nhwc(x0, h, w)]

        wc, bc, wl, bl = params['rdbs']
        wg, bg = params['gff1']
        gff, t5, t11 = rdb_chain_gff(x0, mask, wc, bc, wl, bl, wg, bg, H=h, W=w)
        if self.D > 5:
            feature_maps.append(flat_to_nhwc(t5, h, w))
        if self.D > 11:
            feature_maps.append(flat_to_nhwc(t11, h, w))

        xg = conv3x3_flat(gff, *params['gff2'], mask, H=h, W=w) + f1   # + global residual
        feature_maps.append(flat_to_nhwc(xg, h, w))

        u = xg
        hh, ww = h, w
        if self.r in (2, 3):
            u = conv3x3_flat(u, *params['up'][0], mask, H=hh, W=ww)
            u = pixel_shuffle_nhwc(flat_to_nhwc(u, hh, ww), self.r)
            hh, ww = hh * self.r, ww * self.r
            u = conv3x3_flat(nhwc_to_flat(u), *params['up'][1], _mask(hh, ww),
                             H=hh, W=ww)
        else:  # r == 4
            u = conv3x3_flat(u, *params['up'][0], mask, H=hh, W=ww)
            u = pixel_shuffle_nhwc(flat_to_nhwc(u, hh, ww), 2)
            hh, ww = hh * 2, ww * 2
            u = conv3x3_flat(nhwc_to_flat(u), *params['up'][1], _mask(hh, ww),
                             H=hh, W=ww)
            u = pixel_shuffle_nhwc(flat_to_nhwc(u, hh, ww), 2)
            hh, ww = hh * 2, ww * 2
            u = conv3x3_flat(nhwc_to_flat(u), *params['up'][2], _mask(hh, ww),
                             H=hh, W=ww)
        sr = flat_to_nhwc(u, hh, ww)[..., :self.n_colors]

        to_nchw = lambda t: jnp.transpose(t, (0, 3, 1, 2))
        return [to_nchw(f) for f in feature_maps], to_nchw(sr)

    def forward(self, x_nchw):
        return self._jit_forward(self.params, x_nchw)


# ----------------------------------------------------------------------------
# Plain-JAX reference (same bf16-operand / f32-accumulate policy)
# ----------------------------------------------------------------------------
def _ref_conv3x3(x, w, b, relu=False):
    y = jax.lax.conv_general_dilated(
        x.astype(jnp.bfloat16), jnp.asarray(w, jnp.bfloat16), (1, 1), 'SAME',
        dimension_numbers=('NHWC', 'HWIO', 'NHWC'),
        preferred_element_type=jnp.float32) + jnp.asarray(b).reshape(1, 1, 1, -1)
    return jnp.maximum(y, 0.0) if relu else y


def _ref_conv1x1(x, w, b):
    cin, cout = w.shape[-2], w.shape[-1]
    w2 = jnp.asarray(w, jnp.bfloat16).reshape(cin, cout)
    return (jnp.einsum('nhwc,cd->nhwd', x.astype(jnp.bfloat16), w2,
                       preferred_element_type=jnp.float32)
            + jnp.asarray(b).reshape(1, 1, 1, -1))


def _ref_rdb(x, convs, lff):
    inp = x
    for ww, bb in convs:
        out = _ref_conv3x3(x, ww, bb, relu=True)
        x = jnp.concatenate([x, out], axis=-1)
    return _ref_conv1x1(x, *lff) + inp


def _ref_forward(model, x_nchw):
    raw = model.raw
    x = jnp.transpose(x_nchw, (0, 2, 3, 1)).astype(jnp.float32)
    fmaps = []
    f1 = _ref_conv3x3(x, *raw['sfe1'])
    x = _ref_conv3x3(f1, *raw['sfe2'])
    fmaps.append(x)
    outs = []
    for d in range(model.D):
        x = _ref_rdb(x, *raw['rdbs'][d])
        outs.append(x)
        if d == 5:
            fmaps.append(x)
        if d == 11:
            fmaps.append(x)
    x = _ref_conv1x1(jnp.concatenate(outs, axis=-1), *raw['gff1'])
    x = _ref_conv3x3(x, *raw['gff2']) + f1
    fmaps.append(x)
    u = x
    if model.r in (2, 3):
        u = _ref_conv3x3(u, *raw['up'][0])
        u = pixel_shuffle_nhwc(u, model.r)
        u = _ref_conv3x3(u, *raw['up'][1])
    else:
        u = _ref_conv3x3(u, *raw['up'][0]); u = pixel_shuffle_nhwc(u, 2)
        u = _ref_conv3x3(u, *raw['up'][1]); u = pixel_shuffle_nhwc(u, 2)
        u = _ref_conv3x3(u, *raw['up'][2])
    to_nchw = lambda t: jnp.transpose(t, (0, 3, 1, 2))
    return [to_nchw(f) for f in fmaps], to_nchw(u)


# ----------------------------------------------------------------------------
if __name__ == "__main__":
    args = types.SimpleNamespace(
        scale=[2], G0=16, RDNkSize=3, RDNconfig='A', n_colors=3,
        out_dims='[4]', pool_out='avg')

    key = jax.random.PRNGKey(0)
    pkey, xkey = jax.random.split(key)
    model = RDNPallas(args, pkey)
    x = jax.random.normal(xkey, (2, 3, 16, 16), jnp.float32)   # NCHW like PyTorch

    # unit check: wide-layout 3x3 conv kernel vs XLA conv (same bf16 policy)
    x_nhwc = jnp.transpose(x, (0, 2, 3, 1))
    x_nhwc = jnp.pad(x_nhwc, ((0, 0), (0, 0), (0, 0), (0, model.sfe1_cin - 3)))
    got = flat_to_nhwc(
        conv3x3_flat(nhwc_to_flat(x_nhwc), *model.params['sfe1'], _mask(16, 16),
                     H=16, W=16), 16, 16)
    wpad = np.pad(model.raw['sfe1'][0],
                  ((0, 0), (0, 0), (0, model.sfe1_cin - 3), (0, 0)))
    ref = _ref_conv3x3(x_nhwc, wpad, model.raw['sfe1'][1])
    assert jnp.allclose(got, ref, atol=1e-2, rtol=1e-2), "conv3x3 kernel mismatch"

    # full forward: one jit, 6 pallas_calls
    feature_maps, sr_out = model.forward(x)
    jax.block_until_ready((feature_maps, sr_out))

    assert sr_out.shape == (2, 3, 32, 32)
    assert len(feature_maps) == 4
    assert all(f.shape == (2, 16, 16, 16) for f in feature_maps)

    # end-to-end numerical check against the plain-JAX reference
    ref_maps, ref_sr = jax.jit(lambda xx: _ref_forward(model, xx))(x)
    assert jnp.allclose(sr_out, ref_sr, atol=5e-2, rtol=5e-2), "forward mismatch"
    for a, bm in zip(feature_maps, ref_maps):
        assert jnp.allclose(a, bm, atol=5e-2, rtol=5e-2), "feature map mismatch"

    print("KERNEL_OK")
</pallas_src>

<mosaic_0001>
module attributes {stable_mosaic.version = 11 : i64} {
  func.func @_conv3x3_kernel(%arg0: i32, %arg1: memref<1x384x16xf32, #tpu.memory_space<vmem>>, %arg2: memref<384x1xf32, #tpu.memory_space<vmem>>, %arg3: memref<3x48x16xbf16, #tpu.memory_space<vmem>>, %arg4: memref<1x16xf32, #tpu.memory_space<vmem>>, %arg5: memref<1x384x16xf32, #tpu.memory_space<vmem>>, %arg6: memref<448x48xbf16, #tpu.memory_space<vmem>>) attributes {dimension_semantics = [#tpu.dimension_semantics<parallel>], iteration_bounds = array<i64: 2>, scalar_prefetch = 0 : i64, scratch_operands = 1 : i64, tpu.core_type = #tpu.core_type<tc>, window_params = [{transform_indices = @transform_0, window_bounds = array<i64: 1, 384, 16>}, {pipeline_mode = #tpu.pipeline_mode<synchronous>, transform_indices = @transform_1, window_bounds = array<i64: 384, 1>}, {pipeline_mode = #tpu.pipeline_mode<synchronous>, transform_indices = @transform_2, window_bounds = array<i64: 3, 48, 16>}, {pipeline_mode = #tpu.pipeline_mode<synchronous>, transform_indices = @transform_3, window_bounds = array<i64: 1, 16>}, {transform_indices = @transform_4, window_bounds = array<i64: 1, 384, 16>}]} {
    %cst = arith.constant 0.000000e+00 : bf16
    %0 = vector.broadcast %cst : bf16 to vector<33x48xbf16>
    %c0 = arith.constant 0 : index
    %c0_0 = arith.constant 0 : index
    %1 = vector.load %arg6[%c0, %c0_0] : memref<448x48xbf16, #tpu.memory_space<vmem>>, vector<33x48xbf16>
    tpu.vector_store %arg6[%c0, %c0_0], %0 {strides = array<i32>} : memref<448x48xbf16, #tpu.memory_space<vmem>>, vector<33x48xbf16>,
    %cst_1 = arith.constant 0.000000e+00 : bf16
    %2 = vector.broadcast %cst_1 : bf16 to vector<33x48xbf16>
    %c415 = arith.constant 415 : index
    %c0_2 = arith.constant 0 : index
    %3 = vector.load %arg6[%c415, %c0_2] : memref<448x48xbf16, #tpu.memory_space<vmem>>, vector<33x48xbf16>
    tpu.vector_store %arg6[%c415, %c0_2], %2 {strides = array<i32>} : memref<448x48xbf16, #tpu.memory_space<vmem>>, vector<33x48xbf16>,
    %c0_3 = arith.constant 0 : index
    %c0_4 = arith.constant 0 : index
    %c0_5 = arith.constant 0 : index
    %4 = vector.load %arg1[%c0_3, %c0_4, %c0_5] : memref<1x384x16xf32, #tpu.memory_space<vmem>>, vector<1x384x16xf32>
    %5 = vector.shape_cast %4 : vector<1x384x16xf32> to vector<384x16xf32>
    %6 = arith.truncf %5 : vector<384x16xf32> to vector<384x16xbf16>
    %c33 = arith.constant 33 : index
    %c0_6 = arith.constant 0 : index
    %7 = vector.load %arg6[%c33, %c0_6] : memref<448x48xbf16, #tpu.memory_space<vmem>>, vector<384x16xbf16>
    tpu.vector_store %arg6[%c33, %c0_6], %6 {strides = array<i32>} : memref<448x48xbf16, #tpu.memory_space<vmem>>, vector<384x16xbf16>,
    %c32 = arith.constant 32 : index
    %c16 = arith.constant 16 : index
    %8 = vector.load %arg6[%c32, %c16] : memref<448x48xbf16, #tpu.memory_space<vmem>>, vector<384x16xbf16>
    tpu.vector_store %arg6[%c32, %c16], %6 {strides = array<i32>} : memref<448x48xbf16, #tpu.memory_space<vmem>>, vector<384x16xbf16>,
    %c31 = arith.constant 31 : index
    %c32_7 = arith.constant 32 : index
    %9 = vector.load %arg6[%c31, %c32_7] : memref<448x48xbf16, #tpu.memory_space<vmem>>, vector<384x16xbf16>
    tpu.vector_store %arg6[%c31, %c32_7], %6 {strides = array<i32>} : memref<448x48xbf16, #tpu.memory_space<vmem>>, vector<384x16xbf16>,
    %c0_8 = arith.constant 0 : index
    %c0_9 = arith.constant 0 : index
    %10 = vector.load %arg4[%c0_8, %c0_9] : memref<1x16xf32, #tpu.memory_space<vmem>>, vector<1x16xf32>
    %11 = vector.shape_cast %10 : vector<1x16xf32> to vector<1x16xf32>
    %12 = vector.broadcast %11 : vector<1x16xf32> to vector<128x16xf32>
    %c8 = arith.constant 8 : index
    %c0_10 = arith.constant 0 : index
    %13 = vector.load %arg6[%c8, %c0_10] : memref<448x48xbf16, #tpu.memory_space<vmem>>, vector<128x48xbf16>
    %c0_11 = arith.constant 0 : index
    %c0_12 = arith.constant 0 : index
    %c0_13 = arith.constant 0 : index
    %14 = vector.load %arg3[%c0_11, %c0_12, %c0_13] : memref<3x48x16xbf16, #tpu.memory_space<vmem>>, vector<1x48x16xbf16>
    %15 = vector.shape_cast %14 : vector<1x48x16xbf16> to vector<48x16xbf16>
    %cst_14 = arith.constant dense<0.000000e+00> : vector<128x16xf32>
    %16 = tpu.matmul %13, %15, %cst_14 {dimension_numbers = #tpu.dot_dimension_numbers<[1], [0], [0], [1], [0, 0, 1, 1], [], []>} : vector<128x48xbf16>, vector<48x16xbf16>, vector<128x16xf32> -> vector<128x16xf32>
    %17 = arith.addf %12, %16 : vector<128x16xf32>
    %c32_15 = arith.constant 32 : index
    %c0_16 = arith.constant 0 : index
    %18 = vector.load %arg6[%c32_15, %c0_16] : memref<448x48xbf16, #tpu.memory_space<vmem>>, vector<128x48xbf16>
    %c1 = arith.constant 1 : index
    %c0_17 = arith.constant 0 : index
    %c0_18 = arith.constant 0 : index
    %19 = vector.load %arg3[%c1, %c0_17, %c0_18] : memref<3x48x16xbf16, #tpu.memory_space<vmem>>, vector<1x48x16xbf16>
    %20 = vector.shape_cast %19 : vector<1x48x16xbf16> to vector<48x16xbf16>
    %cst_19 = arith.constant dense<0.000000e+00> : vector<128x16xf32>
    %21 = tpu.matmul %18, %20, %cst_19 {dimension_numbers = #tpu.dot_dimension_numbers<[1], [0], [0], [1], [0, 0, 1, 1], [], []>} : vector<128x48xbf16>, vector<48x16xbf16>, vector<128x16xf32> -> vector<128x16xf32>
    %22 = arith.addf %17, %21 : vector<128x16xf32>
    %c56 = arith.constant 56 : index
    %c0_20 = arith.constant 0 : index
    %23 = vector.load %arg6[%c56, %c0_20] : memref<448x48xbf16, #tpu.memory_space<vmem>>, vector<128x48xbf16>
    %c2 = arith.constant 2 : index
    %c0_21 = arith.constant 0 : index
    %c0_22 = arith.constant 0 : index
    %24 = vector.load %arg3[%c2, %c0_21, %c0_22] : memref<3x48x16xbf16, #tpu.memory_space<vmem>>, vector<1x48x16xbf16>
    %25 = vector.shape_cast %24 : vector<1x48x16xbf16> to vector<48x16xbf16>
    %cst_23 = arith.constant dense<0.000000e+00> : vector<128x16xf32>
    %26 = tpu.matmul %23, %25, %cst_23 {dimension_numbers = #tpu.dot_dimension_numbers<[1], [0], [0], [1], [0, 0, 1, 1], [], []>} : vector<128x48xbf16>, vector<48x16xbf16>, vector<128x16xf32> -> vector<128x16xf32>
    %27 = arith.addf %22, %26 : vector<128x16xf32>
    %c0_24 = arith.constant 0 : index
    %c0_25 = arith.constant 0 : index
    %28 = vector.load %arg2[%c0_24, %c0_25] : memref<384x1xf32, #tpu.memory_space<vmem>>, vector<128x1xf32>
    %29 = vector.broadcast %28 : vector<128x1xf32> to vector<128x16xf32>
    %30 = arith.mulf %27, %29 : vector<128x16xf32>
    %c0_26 = arith.constant 0 : index
    %c0_27 = arith.constant 0 : index
    %c0_28 = arith.constant 0 : index
    %31 = vector.load %arg5[%c0_26, %c0_27, %c0_28] : memref<1x384x16xf32, #tpu.memory_space<vmem>>, vector<1x128x16xf32>
    %32 = vector.shape_cast %31 : vector<1x128x16xf32> to vector<128x16xf32>
    %33 = vector.shape_cast %30 : vector<128x16xf32> to vector<1x128x16xf32>
    tpu.vector_store %arg5[%c0_26, %c0_27, %c0_28], %33 {strides = array<i32>} : memref<1x384x16xf32, #tpu.memory_space<vmem>>, vector<1x128x16xf32>,
    %c136 = arith.constant 136 : index
    %c0_29 = arith.constant 0 : index
    %34 = vector.load %arg6[%c136, %c0_29] : memref<448x48xbf16, #tpu.memory_space<vmem>>, vector<128x48xbf16>
    %c0_30 = arith.constant 0 : index
    %c0_31 = arith.constant 0 : index
    %c0_32 = arith.constant 0 : index
    %35 = vector.load %arg3[%c0_30, %c0_31, %c0_32] : memref<3x48x16xbf16, #tpu.memory_space<vmem>>, vector<1x48x16xbf16>
    %36 = vector.shape_cast %35 : vector<1x48x16xbf16> to vector<48x16xbf16>
    %cst_33 = arith.constant dense<0.000000e+00> : vector<128x16xf32>
    %37 = tpu.matmul %34, %36, %cst_33 {dimension_numbers = #tpu.dot_dimension_numbers<[1], [0], [0], [1], [0, 0, 1, 1], [], []>} : vector<128x48xbf16>, vector<48x16xbf16>, vector<128x16xf32> -> vector<128x16xf32>
    %38 = arith.addf %12, %37 : vector<128x16xf32>
    %c160 = arith.constant 160 : index
    %c0_34 = arith.constant 0 : index
    %39 = vector.load %arg6[%c160, %c0_34] : memref<448x48xbf16, #tpu.memory_space<vmem>>, vector<128x48xbf16>
    %c1_35 = arith.constant 1 : index
    %c0_36 = arith.constant 0 : index
    %c0_37 = arith.constant 0 : index
    %40 = vector.load %arg3[%c1_35, %c0_36, %c0_37] : memref<3x48x16xbf16, #tpu.memory_space<vmem>>, vector<1x48x16xbf16>
    %41 = vector.shape_cast %40 : vector<1x48x16xbf16> to vector<48x16xbf16>
    %cst_38 = arith.constant dense<0.000000e+00> : vector<128x16xf32>
    %42 = tpu.matmul %39, %41, %cst_38 {dimension_numbers = #tpu.dot_dimension_numbers<[1], [0], [0], [1], [0, 0, 1, 1], [], []>} : vector<128x48xbf16>, vector<48x16xbf16>, vector<128x16xf32> -> vector<128x16xf32>
    %43 = arith.addf %38, %42 : vector<128x16xf32>
    %c184 = arith.constant 184 : index
    %c0_39 = arith.constant 0 : index
    %44 = vector.load %arg6[%c184, %c0_39] : memref<448x48xbf16, #tpu.memory_space<vmem>>, vector<128x48xbf16>
    %c2_40 = arith.constant 2 : index
    %c0_41 = arith.constant 0 : index
    %c0_42 = arith.constant 0 : index
    %45 = vector.load %arg3[%c2_40, %c0_41, %c0_42] : memref<3x48x16xbf16, #tpu.memory_space<vmem>>, vector<1x48x16xbf16>
    %46 = vector.shape_cast %45 : vector<1x48x16xbf16> to vector<48x16xbf16>
    %cst_43 = arith.constant dense<0.000000e+00> : vector<128x16xf32>
    %47 = tpu.matmul %44, %46, %cst_43 {dimension_numbers = #tpu.dot_dimension_numbers<[1], [0], [0], [1], [0, 0, 1, 1], [], []>} : vector<128x48xbf16>, vector<48x16xbf16>, vector<128x16xf32> -> vector<128x16xf32>
    %48 = arith.addf %43, %47 : vector<128x16xf32>
    %c128 = arith.constant 128 : index
    %c0_44 = arith.constant 0 : index
    %49 = vector.load %arg2[%c128, %c0_44] : memref<384x1xf32, #tpu.memory_space<vmem>>, vector<128x1xf32>
    %50 = vector.broadcast %49 : vector<128x1xf32> to vector<128x16xf32>
    %51 = arith.mulf %48, %50 : vector<128x16xf32>
    %c0_45 = arith.constant 0 : index
    %c128_46 = arith.constant 128 : index
    %c0_47 = arith.constant 0 : index
    %52 = vector.load %arg5[%c0_45, %c128_46, %c0_47] : memref<1x384x16xf32, #tpu.memory_space<vmem>>, vector<1x128x16xf32>
    %53 = vector.shape_cast %52 : vector<1x128x16xf32> to vector<128x16xf32>
    %54 = vector.shape_cast %51 : vector<128x16xf32> to vector<1x128x16xf32>
    tpu.vector_store %arg5[%c0_45, %c128_46, %c0_47], %54 {strides = array<i32>} : memref<1x384x16xf32, #tpu.memory_space<vmem>>, vector<1x128x16xf32>,
    %c264 = arith.constant 264 : index
    %c0_48 = arith.constant 0 : index
    %55 = vector.load %arg6[%c264, %c0_48] : memref<448x48xbf16, #tpu.memory_space<vmem>>, vector<128x48xbf16>
    %c0_49 = arith.constant 0 : index
    %c0_50 = arith.constant 0 : index
    %c0_51 = arith.constant 0 : index
    %56 = vector.load %arg3[%c0_49, %c0_50, %c0_51] : memref<3x48x16xbf16, #tpu.memory_space<vmem>>, vector<1x48x16xbf16>
    %57 = vector.shape_cast %56 : vector<1x48x16xbf16> to vector<48x16xbf16>
    %cst_52 = arith.constant dense<0.000000e+00> : vector<128x16xf32>
    %58 = tpu.matmul %55, %57, %cst_52 {dimension_numbers = #tpu.dot_dimension_numbers<[1], [0], [0], [1], [0, 0, 1, 1], [], []>} : vector<128x48xbf16>, vector<48x16xbf16>, vector<128x16xf32> -> vector<128x16xf32>
    %59 = arith.addf %12, %58 : vector<128x16xf32>
    %c288 = arith.constant 288 : index
    %c0_53 = arith.constant 0 : index
    %60 = vector.load %arg6[%c288, %c0_53] : memref<448x48xbf16, #tpu.memory_space<vmem>>, vector<128x48xbf16>
    %c1_54 = arith.constant 1 : index
    %c0_55 = arith.constant 0 : index
    %c0_56 = arith.constant 0 : index
    %61 = vector.load %arg3[%c1_54, %c0_55, %c0_56] : memref<3x48x16xbf16, #tpu.memory_space<vmem>>, vector<1x48x16xbf16>
    %62 = vector.shape_cast %61 : vector<1x48x16xbf16> to vector<48x16xbf16>
    %cst_57 = arith.constant dense<0.000000e+00> : vector<128x16xf32>
    %63 = tpu.matmul %60, %62, %cst_57 {dimension_numbers = #tpu.dot_dimension_numbers<[1], [0], [0], [1], [0, 0, 1, 1], [], []>} : vector<128x48xbf16>, vector<48x16xbf16>, vector<128x16xf32> -> vector<128x16xf32>
    %64 = arith.addf %59, %63 : vector<128x16xf32>
    %c312 = arith.constant 312 : index
    %c0_58 = arith.constant 0 : index
    %65 = vector.load %arg6[%c312, %c0_58] : memref<448x48xbf16, #tpu.memory_space<vmem>>, vector<128x48xbf16>
    %c2_59 = arith.constant 2 : index
    %c0_60 = arith.constant 0 : index
    %c0_61 = arith.constant 0 : index
    %66 = vector.load %arg3[%c2_59, %c0_60, %c0_61] : memref<3x48x16xbf16, #tpu.memory_space<vmem>>, vector<1x48x16xbf16>
    %67 = vector.shape_cast %66 : vector<1x48x16xbf16> to vector<48x16xbf16>
    %cst_62 = arith.constant dense<0.000000e+00> : vector<128x16xf32>
    %68 = tpu.matmul %65, %67, %cst_62 {dimension_numbers = #tpu.dot_dimension_numbers<[1], [0], [0], [1], [0, 0, 1, 1], [], []>} : vector<128x48xbf16>, vector<48x16xbf16>, vector<128x16xf32> -> vector<128x16xf32>
    %69 = arith.addf %64, %68 : vector<128x16xf32>
    %c256 = arith.constant 256 : index
    %c0_63 = arith.constant 0 : index
    %70 = vector.load %arg2[%c256, %c0_63] : memref<384x1xf32, #tpu.memory_space<vmem>>, vector<128x1xf32>
    %71 = vector.broadcast %70 : vector<128x1xf32> to vector<128x16xf32>
    %72 = arith.mulf %69, %71 : vector<128x16xf32>
    %c0_64 = arith.constant 0 : index
    %c256_65 = arith.constant 256 : index
    %c0_66 = arith.constant 0 : index
    %73 = vector.load %arg5[%c0_64, %c256_65, %c0_66] : memref<1x384x16xf32, #tpu.memory_space<vmem>>, vector<1x128x16xf32>
    %74 = vector.shape_cast %73 : vector<1x128x16xf32> to vector<128x16xf32>
    %75 = vector.shape_cast %72 : vector<128x16xf32> to vector<1x128x16xf32>
    tpu.vector_store %arg5[%c0_64, %c256_65, %c0_66], %75 {strides = array<i32>} : memref<1x384x16xf32, #tpu.memory_space<vmem>>, vector<1x128x16xf32>,
    return
  }
  func.func @transform_0(%arg0: i32) -> (i32, i32, i32) {
    %c0_i32 = arith.constant 0 : i32
    %c0_i32_0 = arith.constant 0 : i32
    %c0_i32_1 = arith.constant 0 : i32
    return %arg0, %c0_i32, %c0_i32_0 : i32, i32, i32
  }
  func.func @transform_1(%arg0: i32) -> (i32, i32) {
    %c0_i32 = arith.constant 0 : i32
    %c0_i32_0 = arith.constant 0 : i32
    %c0_i32_1 = arith.constant 0 : i32
    return %c0_i32, %c0_i32_0 : i32, i32
  }
  func.func @transform_2(%arg0: i32) -> (i32, i32, i32) {
    %c0_i32 = arith.constant 0 : i32
    %c0_i32_0 = arith.constant 0 : i32
    %c0_i32_1 = arith.constant 0 : i32
    %c0_i32_2 = arith.constant 0 : i32
    return %c0_i32, %c0_i32_0, %c0_i32_1 : i32, i32, i32
  }
  func.func @transform_3(%arg0: i32) -> (i32, i32) {
    %c0_i32 = arith.constant 0 : i32
    %c0_i32_0 = arith.constant 0 : i32
    %c0_i32_1 = arith.constant 0 : i32
    return %c0_i32, %c0_i32_0 : i32, i32
  }
  func.func @transform_4(%arg0: i32) -> (i32, i32, i32) {
    %c0_i32 = arith.constant 0 : i32
    %c0_i32_0 = arith.constant 0 : i32
    %c0_i32_1 = arith.constant 0 : i32
    return %arg0, %c0_i32, %c0_i32_0 : i32, i32, i32
  }
}

</mosaic_0001>

<llo_original>
// kernel: tpu_custom_call.1
$region0: #{tpu_custom_call.1}
  #allocation0 [shape = 'u32[]', space=smem, size = 0x4, offset = 0x4, fixed_abs, tag = 'smem constant byte address 0x4 - core index']
  #allocation1 [shape = 'u32[144,128]{1,0:T(1,128)}', space=vmem, size = 0x12000, scoped, tag = 'internal scratch']
  #allocation2 [shape = 'bf16[448,48]{1,0:T(16,128)(2,1)}', space=vmem, size = 0x1c000, scoped, tag = 'scratch operand']
  %s0 = inlined_call_operand.vmem [shape: f32[2,384,16], index: 0, kind: input, shape index: {}]
  %s1 = inlined_call_operand.vmem [shape: f32[384,1], index: 1, kind: input, shape index: {}]
  %s2 = inlined_call_operand.vmem [shape: bf16[3,48,16], index: 2, kind: input, shape index: {}]
  %s3 = inlined_call_operand.vmem [shape: f32[1,16], index: 3, kind: input, shape index: {}]
  %s4 = inlined_call_operand.vmem [shape: f32[2,384,16], index: 4, kind: output, shape index: {}]
  %s5 = sld [smem:[#allocation0]]
  $region49: #{tpu_custom_call.1} parent=0
    _
  %s7 = ssub.s32 1, %s5
  %s8 = scalar_select 0, %s7, %s5
  loop: start=0, step=1, limit=4
  $region2: #{tpu_custom_call.1} parent=0 // loop_pre_header
    _
  $region3: #{tpu_custom_call.1} parent=0 // loop_header
    %s10 = sphi 0, %s14
    %p11 = scmp.ge.s32.totalorder %s10, 4
    %s20 = sphi 0, %s22
    %s23 = sphi 0, %s20
    %s24 = sphi 0, %s23
    %s40 = sphi 0, %s24
    %s44 = sphi 0, %s44
    %s46 = sphi 0, %s44
    %s47 = sphi 0, %s46
    %s61 = sphi 0, %s47
    %s65 = sphi 0, %s65
    %s67 = sphi 0, %s65
    %s68 = sphi 0, %s67
    %s82 = sphi 0, %s68
    %s86 = sphi 0, %s86
    %s88 = sphi 0, %s86
    %s89 = sphi 0, %s88
    %s103 = sphi 0, %s89
    %s109 = sphi 0, %s111
    %s112 = sphi 0, %s109
    %s113 = sphi 0, %s112
    %s129 = sphi 0, %s113
  $region4: #{tpu_custom_call.1} parent=0 // loop_header_branch
    %13 = sbr.rel (%p11) target = $region8
  $region5: #{tpu_custom_call.1} parent=0 // loop_body
    %s15 = ssub.s32 %s10, 1
    %s16 = ssub.s32 %s10, 2
    %s17 = sadd.s32 %s10, 1
    %s18 = ssub.s32 %s10, %s17
    %p19 = scmp.eq.s32.totalorder %s18, 0
    %s21 = sadd.s32 %s20, 1
    %s22 = scalar_select %p19, %s20, %s21
    %p25 = pneg %p19
    %p26 = scmp.eq.s32.totalorder %s10, 1
    %p27 = por %p25, %p26
    %p28 = scmp.ne.s32.totalorder %s20, %s23
    %p29 = scmp.eq.s32.totalorder %s10, 0
    %p30 = por %p28, %p29
    %p31 = scmp.ne.s32.totalorder %s20, %s23
    %p32 = scmp.eq.s32.totalorder %s15, 1
    %p33 = por %p31, %p32
    %p34 = scmp.ne.s32.totalorder %s23, %s24
    %p35 = scmp.eq.s32.totalorder %s15, 0
    %p36 = por %p34, %p35
    %p37 = scmp.ne.s32.totalorder %s23, %s24
    %p38 = scmp.eq.s32.totalorder %s16, 1
    %p39 = por %p37, %p38
    %p41 = scmp.ne.s32.totalorder %s24, %s40
    %p42 = scmp.eq.s32.totalorder %s16, 0
    %p43 = por %p41, %p42
    %s45 = sadd.s32 %s44, 1
    %p48 = scmp.eq.s32.totalorder %s10, 1
    %p49 = scmp.ne.s32.totalorder %s44, %s46
    %p50 = scmp.eq.s32.totalorder %s10, 0
    %p51 = por %p49, %p50
    %p52 = scmp.ne.s32.totalorder %s44, %s46
    %p53 = scmp.eq.s32.totalorder %s15, 1
    %p54 = por %p52, %p53
    %p55 = scmp.ne.s32.totalorder %s46, %s47
    %p56 = scmp.eq.s32.totalorder %s15, 0
    %p57 = por %p55, %p56
    %p58 = scmp.ne.s32.totalorder %s46, %s47
    %p59 = scmp.eq.s32.totalorder %s16, 1
    %p60 = por %p58, %p59
    %p62 = scmp.ne.s32.totalorder %s47, %s61
    %p63 = scmp.eq.s32.totalorder %s16, 0
    %p64 = por %p62, %p63
    %s66 = sadd.s32 %s65, 1
    %p69 = scmp.eq.s32.totalorder %s10, 1
    %p70 = scmp.ne.s32.totalorder %s65, %s67
    %p71 = scmp.eq.s32.totalorder %s10, 0
    %p72 = por %p70, %p71
    %p73 = scmp.ne.s32.totalorder %s65, %s67
    %p74 = scmp.eq.s32.totalorder %s15, 1
    %p75 = por %p73, %p74
    %p76 = scmp.ne.s32.totalorder %s67, %s68
    %p77 = scmp.eq.s32.totalorder %s15, 0
    %p78 = por %p76, %p77
    %p79 = scmp.ne.s32.totalorder %s67, %s68
    %p80 = scmp.eq.s32.totalorder %s16, 1
    %p81 = por %p79, %p80
    %p83 = scmp.ne.s32.totalorder %s68, %s82
    %p84 = scmp.eq.s32.totalorder %s16, 0
    %p85 = por %p83, %p84
    %s87 = sadd.s32 %s86, 1
    %p90 = scmp.eq.s32.totalorder %s10, 1
    %p91 = scmp.ne.s32.totalorder %s86, %s88
    %p92 = scmp.eq.s32.totalorder %s10, 0
    %p93 = por %p91, %p92
    %p94 = scmp.ne.s32.totalorder %s86, %s88
    %p95 = scmp.eq.s32.totalorder %s15, 1
    %p96 = por %p94, %p95
    %p97 = scmp.ne.s32.totalorder %s88, %s89
    %p98 = scmp.eq.s32.totalorder %s15, 0
    %p99 = por %p97, %p98
    %p100 = scmp.ne.s32.totalorder %s88, %s89
    %p101 = scmp.eq.s32.totalorder %s16, 1
    %p102 = por %p100, %p101
    %p104 = scmp.ne.s32.totalorder %s89, %s103
    %p105 = scmp.eq.s32.totalorder %s16, 0
    %p106 = por %p104, %p105
    %s107 = ssub.s32 %s10, %s17
    %p108 = scmp.eq.s32.totalorder %s107, 0
    %s110 = sadd.s32 %s109, 1
    %s111 = scalar_select %p108, %s109, %s110
    %p114 = pneg %p108
    %p115 = scmp.eq.s32.totalorder %s10, 1
    %p116 = por %p114, %p115
    %p117 = scmp.ne.s32.totalorder %s109, %s112
    %p118 = scmp.eq.s32.totalorder %s10, 0
    %p119 = por %p117, %p118
    %p120 = scmp.ne.s32.totalorder %s109, %s112
    %p121 = scmp.eq.s32.totalorder %s15, 1
    %p122 = por %p120, %p121
    %p123 = scmp.ne.s32.totalorder %s112, %s113
    %p124 = scmp.eq.s32.totalorder %s15, 0
    %p125 = por %p123, %p124
    %p126 = scmp.ne.s32.totalorder %s112, %s113
    %p127 = scmp.eq.s32.totalorder %s16, 1
    %p128 = por %p126, %p127
    %p130 = scmp.ne.s32.totalorder %s113, %s129
    %p131 = scmp.eq.s32.totalorder %s16, 0
    %p132 = por %p130, %p131
    %p133 = scmp.le.s32.totalorder 1, %s10
    %p134 = scmp.lt.s32.totalorder %s10, 3
    %p135 = pnand %p133, %p134
    %p136 = pneg %p135
    // Predicated region
    $region9: #{tpu_custom_call.1} parent=5 // pred_check
      _
    $region10: #{tpu_custom_call.1} parent=5 // pred_check_branch
      %138 = sbr.rel (%p135) target = $region12
    $region11: #{tpu_custom_call.1} parent=5 // pred_region
      %s139 = ssub.s32 %s10, 1
      // Predicated region
      $region13: #{tpu_custom_call.1} parent=11 // pred_check
        %p140 = pneg %p57
      $region14: #{tpu_custom_call.1} parent=11 // pred_check_branch
        %142 = sbr.rel (%p140) target = $region16
      $region15: #{tpu_custom_call.1} parent=11 // pred_region
        _
      $region16: #{tpu_custom_call.1} parent=11 // pred_fallthru
        _
      // Predicated region
      $region17: #{tpu_custom_call.1} parent=11 // pred_check
        %p143 = pneg %p78
      $region18: #{tpu_custom_call.1} parent=11 // pred_check_branch
        %145 = sbr.rel (%p143) target = $region20
      $region19: #{tpu_custom_call.1} parent=11 // pred_region
        _
      $region20: #{tpu_custom_call.1} parent=11 // pred_fallthru
        _
      // Predicated region
      $region21: #{tpu_custom_call.1} parent=11 // pred_check
        %p146 = pneg %p99
      $region22: #{tpu_custom_call.1} parent=11 // pred_check_branch
        %148 = sbr.rel (%p146) target = $region24
      $region23: #{tpu_custom_call.1} parent=11 // pred_region
        _
      $region24: #{tpu_custom_call.1} parent=11 // pred_fallthru
        _
    $region12: #{tpu_custom_call.1} parent=5 // pred_fallthru
      _
    %p149 = scmp.lt.s32.totalorder %s10, 2
    // Predicated region
    $region25: #{tpu_custom_call.1} parent=5 // pred_check
      %p150 = pneg %p149
    $region26: #{tpu_custom_call.1} parent=5 // pred_check_branch
      %152 = sbr.rel (%p150) target = $region28
    $region27: #{tpu_custom_call.1} parent=5 // pred_region
      // Predicated region
      $region29: #{tpu_custom_call.1} parent=27 // pred_check
        %p153 = pneg %p30
      $region30: #{tpu_custom_call.1} parent=27 // pred_check_branch
        %155 = sbr.rel (%p153) target = $region32
      $region31: #{tpu_custom_call.1} parent=27 // pred_region
        %p156 = scmp.lt.s32.totalorder %s10, 1
        %s157 = scalar_select %p156, %s10, 1
        %s158 = smul.addr %s157, 48
        %s159 = smul.addr %s158, 8
        %s160 = scalar_lea.vmem %s0, %s159
      $region32: #{tpu_custom_call.1} parent=27 // pred_fallthru
        _
    $region28: #{tpu_custom_call.1} parent=5 // pred_fallthru
      _
    %p161 = scmp.le.s32.totalorder 1, %s10
    %p162 = scmp.lt.s32.totalorder %s10, 3
    %p163 = pnand %p161, %p162
    %p164 = pneg %p163
    // Predicated region
    $region33: #{tpu_custom_call.1} parent=5 // pred_check
      _
    $region34: #{tpu_custom_call.1} parent=5 // pred_check_branch
      %166 = sbr.rel (%p163) target = $region36
    $region35: #{tpu_custom_call.1} parent=5 // pred_region
      %s167 = ssub.s32 %s10, 1
      %p168 = scmp.lt.s32.totalorder %s15, 1
      %s169 = scalar_select %p168, %s15, 1
      %s170 = smul.addr %s169, 48
      %s171 = smul.addr %s170, 8
      %s172 = scalar_lea.vmem %s0, %s171
      %p173 = pneg %p36
      %p174 = pneg %p33
      %p175 = pneg %p57
      %p176 = pneg %p54
      %p177 = pneg %p78
      %p178 = pneg %p75
      %p179 = pneg %p99
      %p180 = pneg %p96
      %p181 = pneg %p125
      %p182 = pneg %p122
      %p183 = scmp.lt.s32.totalorder %s15, 1
      %s184 = scalar_select %p183, %s15, 1
      %s185 = smul.addr %s184, 48
      %s186 = smul.addr %s185, 8
      %s187 = scalar_lea.vmem %s4, %s186
      %p188 = scmp.lt.s32.totalorder %s15, 1
      %s189 = scalar_select %p188, %s15, 1
      %s190 = smul.addr %s189, 48
      %s191 = smul.addr %s190, 8
      %s192 = scalar_lea.vmem %s0, %s191
      %p193 = scmp.lt.s32.totalorder %s15, 1
      %s194 = scalar_select %p193, %s15, 1
      %s195 = smul.addr %s194, 48
      %s196 = smul.addr %s195, 8
      %s197 = scalar_lea.vmem %s4, %s196
      %vm199 = vcmask 392192
      %200 = vst.msk [vmem:[#allocation2] sm:$0xff] %vm199, 0
      %201 = vst.msk [vmem:[#allocation2 + $0x8] sm:$0xff] %vm199, 0
      %vm202 = vcmask 385024
      %vm203 = vsmask.f32 256
      %vm204 = vmand %vm202, %vm203
      %v205 = vld [vmem:[#allocation2 + $0x10] sm:$0x1]
      %v206 = vsel %vm204, 0, %v205
      %207 = vst [vmem:[#allocation2 + $0x10] sm:$0x1] %v206
      %vm208 = vcmask 392199
      %vm209 = vsmask.f32 7966
      %vm210 = vmand %vm208, %vm209
      %v211 = vld [vmem:[#allocation2 + $0xc8] sm:$0x80]
      %v212 = vsel %vm210, 0, %v211
      %213 = vst [vmem:[#allocation2 + $0xc8] sm:$0x80] %v212
      %214 = vst.msk [vmem:[#allocation2 + $0xd0] sm:$0xff] %vm199, 0
      %215 = vst.msk [vmem:[#allocation2 + $0xd8] sm:$0xff] %vm199, 0
      %v216 = vld [vmem:[%s192] sm:$0xff]
      %v217 = vld [vmem:[%s192 + $0x8] sm:$0xff]
      %v218 = vld [vmem:[%s192 + $0x10] sm:$0xff]
      %v219 = vld [vmem:[%s192 + $0x18] sm:$0xff]
      %v220 = vld [vmem:[%s192 + $0x20] sm:$0xff]
      %v221 = vld [vmem:[%s192 + $0x28] sm:$0xff]
      %v222 = vld [vmem:[%s192 + $0x30] sm:$0xff]
      %v223 = vld [vmem:[%s192 + $0x38] sm:$0xff]
      %v224 = vld [vmem:[%s192 + $0x40] sm:$0xff]
      %v225 = vld [vmem:[%s192 + $0x48] sm:$0xff]
      %v226 = vld [vmem:[%s192 + $0x50] sm:$0xff]
      %v227 = vld [vmem:[%s192 + $0x58] sm:$0xff]
      %v228 = vld [vmem:[%s192 + $0x60] sm:$0xff]
      %v229 = vld [vmem:[%s192 + $0x68] sm:$0xff]
      %v230 = vld [vmem:[%s192 + $0x70] sm:$0xff]
      %v231 = vld [vmem:[%s192 + $0x78] sm:$0xff]
      %v232 = vld [vmem:[%s192 + $0x80] sm:$0xff]
      %v233 = vld [vmem:[%s192 + $0x88] sm:$0xff]
      %v234 = vld [vmem:[%s192 + $0x90] sm:$0xff]
      %v235 = vld [vmem:[%s192 + $0x98] sm:$0xff]
      %v236 = vld [vmem:[%s192 + $0xa0] sm:$0xff]
      %v237 = vld [vmem:[%s192 + $0xa8] sm:$0xff]
      %v238 = vld [vmem:[%s192 + $0xb0] sm:$0xff]
      %v239 = vld [vmem:[%s192 + $0xb8] sm:$0xff]
      %v240 = vld [vmem:[%s192 + $0xc0] sm:$0xff]
      %v241 = vld [vmem:[%s192 + $0xc8] sm:$0xff]
      %v242 = vld [vmem:[%s192 + $0xd0] sm:$0xff]
      %v243 = vld [vmem:[%s192 + $0xd8] sm:$0xff]
      %v244 = vld [vmem:[%s192 + $0xe0] sm:$0xff]
      %v245 = vld [vmem:[%s192 + $0xe8] sm:$0xff]
      %v246 = vld [vmem:[%s192 + $0xf0] sm:$0xff]
      %v247 = vld [vmem:[%s192 + $0xf8] sm:$0xff]
      %v248 = vld [vmem:[%s192 + $0x100] sm:$0xff]
      %v249 = vld [vmem:[%s192 + $0x108] sm:$0xff]
      %v250 = vld [vmem:[%s192 + $0x110] sm:$0xff]
      %v251 = vld [vmem:[%s192 + $0x118] sm:$0xff]
      %v252 = vld [vmem:[%s192 + $0x120] sm:$0xff]
      %v253 = vld [vmem:[%s192 + $0x128] sm:$0xff]
      %v254 = vld [vmem:[%s192 + $0x130] sm:$0xff]
      %v255 = vld [vmem:[%s192 + $0x138] sm:$0xff]
      %v256 = vld [vmem:[%s192 + $0x140] sm:$0xff]
      %v257 = vld [vmem:[%s192 + $0x148] sm:$0xff]
      %v258 = vld [vmem:[%s192 + $0x150] sm:$0xff]
      %v259 = vld [vmem:[%s192 + $0x158] sm:$0xff]
      %v260 = vld [vmem:[%s192 + $0x160] sm:$0xff]
      %v261 = vld [vmem:[%s192 + $0x168] sm:$0xff]
      %v262 = vld [vmem:[%s192 + $0x170] sm:$0xff]
      %v263 = vld [vmem:[%s192 + $0x178] sm:$0xff]
      %v264 = vpack.c.bf16 %v217, %v216
      %v265 = vpack.c.bf16 %v219, %v218
      %v266 = vpack.c.bf16 %v221, %v220
      %v267 = vpack.c.bf16 %v223, %v222
      %v268 = vpack.c.bf16 %v225, %v224
      %v269 = vpack.c.bf16 %v227, %v226
      %v270 = vpack.c.bf16 %v229, %v228
      %v271 = vpack.c.bf16 %v231, %v230
      %v272 = vpack.c.bf16 %v233, %v232
      %v273 = vpack.c.bf16 %v235, %v234
      %v274 = vpack.c.bf16 %v237, %v236
      %v275 = vpack.c.bf16 %v239, %v238
      %v276 = vpack.c.bf16 %v241, %v240
      %v277 = vpack.c.bf16 %v243, %v242
      %v278 = vpack.c.bf16 %v245, %v244
      %v279 = vpack.c.bf16 %v247, %v246
      %v280 = vpack.c.bf16 %v249, %v248
      %v281 = vpack.c.bf16 %v251, %v250
      %v282 = vpack.c.bf16 %v253, %v252
      %v283 = vpack.c.bf16 %v255, %v254
      %v284 = vpack.c.bf16 %v257, %v256
      %v285 = vpack.c.bf16 %v259, %v258
      %v286 = vpack.c.bf16 %v261, %v260
      %v287 = vpack.c.bf16 %v263, %v262
      %v289 = vshrl.u32 %v264, 16
      %v291 = vrot.slane %v289, 7
      %v292 = vshll.u32 %v264, 16
      %v294 = vor.u32 %v291, %v292
      %v296 = vshrl.u32 %v265, 16
      %v298 = vrot.slane %v296, 7
      %v299 = vshll.u32 %v265, 16
      %v301 = vor.u32 %v298, %v299
      %v302 = vsel %vm203, %v291, %v301
      %v304 = vshrl.u32 %v266, 16
      %v306 = vrot.slane %v304, 7
      %v307 = vshll.u32 %v266, 16
      %v309 = vor.u32 %v306, %v307
      %v310 = vsel %vm203, %v298, %v309
      %v312 = vshrl.u32 %v267, 16
      %v314 = vrot.slane %v312, 7
      %v315 = vshll.u32 %v267, 16
      %v317 = vor.u32 %v314, %v315
      %v318 = vsel %vm203, %v306, %v317
      %v320 = vshrl.u32 %v268, 16
      %v322 = vrot.slane %v320, 7
      %v323 = vshll.u32 %v268, 16
      %v325 = vor.u32 %v322, %v323
      %v326 = vsel %vm203, %v314, %v325
      %v328 = vshrl.u32 %v269, 16
      %v330 = vrot.slane %v328, 7
      %v331 = vshll.u32 %v269, 16
      %v333 = vor.u32 %v330, %v331
      %v334 = vsel %vm203, %v322, %v333
      %v336 = vshrl.u32 %v270, 16
      %v338 = vrot.slane %v336, 7
      %v339 = vshll.u32 %v270, 16
      %v341 = vor.u32 %v338, %v339
      %v342 = vsel %vm203, %v330, %v341
      %v344 = vshrl.u32 %v271, 16
      %v346 = vrot.slane %v344, 7
      %v347 = vshll.u32 %v271, 16
      %v349 = vor.u32 %v346, %v347
      %v350 = vsel %vm203, %v338, %v349
      %v352 = vshrl.u32 %v272, 16
      %v354 = vrot.slane %v352, 7
      %v355 = vshll.u32 %v272, 16
      %v357 = vor.u32 %v354, %v355
      %v358 = vsel %vm203, %v346, %v357
      %v360 = vshrl.u32 %v273, 16
      %v362 = vrot.slane %v360, 7
      %v363 = vshll.u32 %v273, 16
      %v365 = vor.u32 %v362, %v363
      %v366 = vsel %vm203, %v354, %v365
      %v368 = vshrl.u32 %v274, 16
      %v370 = vrot.slane %v368, 7
      %v371 = vshll.u32 %v274, 16
      %v373 = vor.u32 %v370, %v371
      %v374 = vsel %vm203, %v362, %v373
      %v376 = vshrl.u32 %v275, 16
      %v378 = vrot.slane %v376, 7
      %v379 = vshll.u32 %v275, 16
      %v381 = vor.u32 %v378, %v379
      %v382 = vsel %vm203, %v370, %v381
      %v384 = vshrl.u32 %v276, 16
      %v386 = vrot.slane %v384, 7
      %v387 = vshll.u32 %v276, 16
      %v389 = vor.u32 %v386, %v387
      %v390 = vsel %vm203, %v378, %v389
      %v392 = vshrl.u32 %v277, 16
      %v394 = vrot.slane %v392, 7
      %v395 = vshll.u32 %v277, 16
      %v397 = vor.u32 %v394, %v395
      %v398 = vsel %vm203, %v386, %v397
      %v400 = vshrl.u32 %v278, 16
      %v402 = vrot.slane %v400, 7
      %v403 = vshll.u32 %v278, 16
      %v405 = vor.u32 %v402, %v403
      %v406 = vsel %vm203, %v394, %v405
      %v408 = vshrl.u32 %v279, 16
      %v410 = vrot.slane %v408, 7
      %v411 = vshll.u32 %v279, 16
      %v413 = vor.u32 %v410, %v411
      %v414 = vsel %vm203, %v402, %v413
      %v416 = vshrl.u32 %v280, 16
      %v418 = vrot.slane %v416, 7
      %v419 = vshll.u32 %v280, 16
      %v421 = vor.u32 %v418, %v419
      %v422 = vsel %vm203, %v410, %v421
      %v424 = vshrl.u32 %v281, 16
      %v426 = vrot.slane %v424, 7
      %v427 = vshll.u32 %v281, 16
      %v429 = vor.u32 %v426, %v427
      %v430 = vsel %vm203, %v418, %v429
      %v432 = vshrl.u32 %v282, 16
      %v434 = vrot.slane %v432, 7
      %v435 = vshll.u32 %v282, 16
      %v437 = vor.u32 %v434, %v435
      %v438 = vsel %vm203, %v426, %v437
      %v440 = vshrl.u32 %v283, 16
      %v442 = vrot.slane %v440, 7
      %v443 = vshll.u32 %v283, 16
      %v445 = vor.u32 %v442, %v443
      %v446 = vsel %vm203, %v434, %v445
      %v448 = vshrl.u32 %v284, 16
      %v450 = vrot.slane %v448, 7
      %v451 = vshll.u32 %v284, 16
      %v453 = vor.u32 %v450, %v451
      %v454 = vsel %vm203, %v442, %v453
      %v456 = vshrl.u32 %v285, 16
      %v458 = vrot.slane %v456, 7
      %v459 = vshll.u32 %v285, 16
      %v461 = vor.u32 %v458, %v459
      %v462 = vsel %vm203, %v450, %v461
      %v464 = vshrl.u32 %v286, 16
      %v466 = vrot.slane %v464, 7
      %v467 = vshll.u32 %v286, 16
      %v469 = vor.u32 %v466, %v467
      %v470 = vsel %vm203, %v458, %v469
      %v472 = vshrl.u32 %v287, 16
      %v474 = vrot.slane %v472, 7
      %v475 = vshll.u32 %v287, 16
      %v477 = vor.u32 %v474, %v475
      %v478 = vsel %vm203, %v466, %v477
      %vm504 = vcmask 130048
      %vm505 = vsmask.f32 7938
      %vm506 = vmand %vm504, %vm505
      %v507 = vld [vmem:[#allocation2 + $0x10] sm:$0xff]
      %v508 = vsel %vm506, %v294, %v507
      %509 = vst [vmem:[#allocation2 + $0x10] sm:$0xff] %v508
      %vm510 = vcmask 130048
      %511 = vst.msk [vmem:[#allocation2 + $0x18] sm:$0xff] %vm510, %v302
      %512 = vst.msk [vmem:[#allocation2 + $0x20] sm:$0xff] %vm510, %v310
      %513 = vst.msk [vmem:[#allocation2 + $0x28] sm:$0xff] %vm510, %v318
      %514 = vst.msk [vmem:[#allocation2 + $0x30] sm:$0xff] %vm510, %v326
      %515 = vst.msk [vmem:[#allocation2 + $0x38] sm:$0xff] %vm510, %v334
      %516 = vst.msk [vmem:[#allocation2 + $0x40] sm:$0xff] %vm510, %v342
      %517 = vst.msk [vmem:[#allocation2 + $0x48] sm:$0xff] %vm510, %v350
      %518 = vst.msk [vmem:[#allocation2 + $0x50] sm:$0xff] %vm510, %v358
      %519 = vst.msk [vmem:[#allocation2 + $0x58] sm:$0xff] %vm510, %v366
      %520 = vst.msk [vmem:[#allocation2 + $0x60] sm:$0xff] %vm510, %v374
      %521 = vst.msk [vmem:[#allocation2 + $0x68] sm:$0xff] %vm510, %v382
      %522 = vst.msk [vmem:[#allocation2 + $0x70] sm:$0xff] %vm510, %v390
      %523 = vst.msk [vmem:[#allocation2 + $0x78] sm:$0xff] %vm510, %v398
      %524 = vst.msk [vmem:[#allocation2 + $0x80] sm:$0xff] %vm510, %v406
      %525 = vst.msk [vmem:[#allocation2 + $0x88] sm:$0xff] %vm510, %v414
      %526 = vst.msk [vmem:[#allocation2 + $0x90] sm:$0xff] %vm510, %v422
      %527 = vst.msk [vmem:[#allocation2 + $0x98] sm:$0xff] %vm510, %v430
      %528 = vst.msk [vmem:[#allocation2 + $0xa0] sm:$0xff] %vm510, %v438
      %529 = vst.msk [vmem:[#allocation2 + $0xa8] sm:$0xff] %vm510, %v446
      %530 = vst.msk [vmem:[#allocation2 + $0xb0] sm:$0xff] %vm510, %v454
      %531 = vst.msk [vmem:[#allocation2 + $0xb8] sm:$0xff] %vm510, %v462
      %532 = vst.msk [vmem:[#allocation2 + $0xc0] sm:$0xff] %vm510, %v470
      %533 = vst.msk [vmem:[#allocation2 + $0xc8] sm:$0xff] %vm510, %v478
      %vm534 = vcmask 122880
      %vm535 = vmand %vm534, %vm203
      %v536 = vld [vmem:[#allocation2 + $0xd0] sm:$0x1]
      %v537 = vsel %vm535, %v474, %v536
      %538 = vst [vmem:[#allocation2 + $0xd0] sm:$0x1] %v537
      %563 = vrot.lane.b32.xlu0 %v264, 16
      %v564 = vpop.permute.xlu0 %563
      %565 = vrot.lane.b32.xlu0 %v265, 16
      %v566 = vpop.permute.xlu0 %565
      %567 = vrot.lane.b32.xlu0 %v266, 16
      %v568 = vpop.permute.xlu0 %567
      %569 = vrot.lane.b32.xlu0 %v267, 16
      %v570 = vpop.permute.xlu0 %569
      %571 = vrot.lane.b32.xlu0 %v268, 16
      %v572 = vpop.permute.xlu0 %571
      %573 = vrot.lane.b32.xlu0 %v269, 16
      %v574 = vpop.permute.xlu0 %573
      %575 = vrot.lane.b32.xlu0 %v270, 16
      %v576 = vpop.permute.xlu0 %575
      %577 = vrot.lane.b32.xlu0 %v271, 16
      %v578 = vpop.permute.xlu0 %577
      %579 = vrot.lane.b32.xlu0 %v272, 16
      %v580 = vpop.permute.xlu0 %579
      %581 = vrot.lane.b32.xlu0 %v273, 16
      %v582 = vpop.permute.xlu0 %581
      %583 = vrot.lane.b32.xlu0 %v274, 16
      %v584 = vpop.permute.xlu0 %583
      %585 = vrot.lane.b32.xlu0 %v275, 16
      %v586 = vpop.permute.xlu0 %585
      %587 = vrot.lane.b32.xlu0 %v276, 16
      %v588 = vpop.permute.xlu0 %587
      %589 = vrot.lane.b32.xlu0 %v277, 16
      %v590 = vpop.permute.xlu0 %589
      %591 = vrot.lane.b32.xlu0 %v278, 16
      %v592 = vpop.permute.xlu0 %591
      %593 = vrot.lane.b32.xlu0 %v279, 16
      %v594 = vpop.permute.xlu0 %593
      %595 = vrot.lane.b32.xlu0 %v280, 16
      %v596 = vpop.permute.xlu0 %595
      %597 = vrot.lane.b32.xlu0 %v281, 16
      %v598 = vpop.permute.xlu0 %597
      %599 = vrot.lane.b32.xlu0 %v282, 16
      %v600 = vpop.permute.xlu0 %599
      %601 = vrot.lane.b32.xlu0 %v283, 16
      %v602 = vpop.permute.xlu0 %601
      %603 = vrot.lane.b32.xlu0 %v284, 16
      %v604 = vpop.permute.xlu0 %603
      %605 = vrot.lane.b32.xlu0 %v285, 16
      %v606 = vpop.permute.xlu0 %605
      %607 = vrot.lane.b32.xlu0 %v286, 16
      %v608 = vpop.permute.xlu0 %607
      %609 = vrot.lane.b32.xlu0 %v287, 16
      %v610 = vpop.permute.xlu0 %609
      %vm635 = vcmask 261248
      %636 = vst.msk [vmem:[#allocation2 + $0x10] sm:$0xff] %vm635, %v564
      %637 = vst.msk [vmem:[#allocation2 + $0x18] sm:$0xff] %vm635, %v566
      %638 = vst.msk [vmem:[#allocation2 + $0x20] sm:$0xff] %vm635, %v568
      %639 = vst.msk [vmem:[#allocation2 + $0x28] sm:$0xff] %vm635, %v570
      %640 = vst.msk [vmem:[#allocation2 + $0x30] sm:$0xff] %vm635, %v572
      %641 = vst.msk [vmem:[#allocation2 + $0x38] sm:$0xff] %vm635, %v574
      %642 = vst.msk [vmem:[#allocation2 + $0x40] sm:$0xff] %vm635, %v576
      %643 = vst.msk [vmem:[#allocation2 + $0x48] sm:$0xff] %vm635, %v578
      %644 = vst.msk [vmem:[#allocation2 + $0x50] sm:$0xff] %vm635, %v580
      %645 = vst.msk [vmem:[#allocation2 + $0x58] sm:$0xff] %vm635, %v582
      %646 = vst.msk [vmem:[#allocation2 + $0x60] sm:$0xff] %vm635, %v584
      %647 = vst.msk [vmem:[#allocation2 + $0x68] sm:$0xff] %vm635, %v586
      %648 = vst.msk [vmem:[#allocation2 + $0x70] sm:$0xff] %vm635, %v588
      %649 = vst.msk [vmem:[#allocation2 + $0x78] sm:$0xff] %vm635, %v590
      %650 = vst.msk [vmem:[#allocation2 + $0x80] sm:$0xff] %vm635, %v592
      %651 = vst.msk [vmem:[#allocation2 + $0x88] sm:$0xff] %vm635, %v594
      %652 = vst.msk [vmem:[#allocation2 + $0x90] sm:$0xff] %vm635, %v596
      %653 = vst.msk [vmem:[#allocation2 + $0x98] sm:$0xff] %vm635, %v598
      %654 = vst.msk [vmem:[#allocation2 + $0xa0] sm:$0xff] %vm635, %v600
      %655 = vst.msk [vmem:[#allocation2 + $0xa8] sm:$0xff] %vm635, %v602
      %656 = vst.msk [vmem:[#allocation2 + $0xb0] sm:$0xff] %vm635, %v604
      %657 = vst.msk [vmem:[#allocation2 + $0xb8] sm:$0xff] %vm635, %v606
      %658 = vst.msk [vmem:[#allocation2 + $0xc0] sm:$0xff] %vm635, %v608
      %659 = vst.msk [vmem:[#allocation2 + $0xc8] sm:$0xff] %vm635, %v610
      %vm660 = vsmask.f32 7424
      %v661 = vrot.slane %v292, 1
      %v662 = vor.u32 %v289, %v661
      %v663 = vrot.slane %v299, 1
      %v664 = vsel %vm660, %v662, %v663
      %v665 = vor.u32 %v296, %v663
      %v666 = vrot.slane %v307, 1
      %v667 = vsel %vm660, %v665, %v666
      %v668 = vor.u32 %v304, %v666
      %v669 = vrot.slane %v315, 1
      %v670 = vsel %vm660, %v668, %v669
      %v671 = vor.u32 %v312, %v669
      %v672 = vrot.slane %v323, 1
      %v673 = vsel %vm660, %v671, %v672
      %v674 = vor.u32 %v320, %v672
      %v675 = vrot.slane %v331, 1
      %v676 = vsel %vm660, %v674, %v675
      %v677 = vor.u32 %v328, %v675
      %v678 = vrot.slane %v339, 1
      %v679 = vsel %vm660, %v677, %v678
      %v680 = vor.u32 %v336, %v678
      %v681 = vrot.slane %v347, 1
      %v682 = vsel %vm660, %v680, %v681
      %v683 = vor.u32 %v344, %v681
      %v684 = vrot.slane %v355, 1
      %v685 = vsel %vm660, %v683, %v684
      %v686 = vor.u32 %v352, %v684
      %v687 = vrot.slane %v363, 1
      %v688 = vsel %vm660, %v686, %v687
      %v689 = vor.u32 %v360, %v687
      %v690 = vrot.slane %v371, 1
      %v691 = vsel %vm660, %v689, %v690
      %v692 = vor.u32 %v368, %v690
      %v693 = vrot.slane %v379, 1
      %v694 = vsel %vm660, %v692, %v693
      %v695 = vor.u32 %v376, %v693
      %v696 = vrot.slane %v387, 1
      %v697 = vsel %vm660, %v695, %v696
      %v698 = vor.u32 %v384, %v696
      %v699 = vrot.slane %v395, 1
      %v700 = vsel %vm660, %v698, %v699
      %v701 = vor.u32 %v392, %v699
      %v702 = vrot.slane %v403, 1
      %v703 = vsel %vm660, %v701, %v702
      %v704 = vor.u32 %v400, %v702
      %v705 = vrot.slane %v411, 1
      %v706 = vsel %vm660, %v704, %v705
      %v707 = vor.u32 %v408, %v705
      %v708 = vrot.slane %v419, 1
      %v709 = vsel %vm660, %v707, %v708
      %v710 = vor.u32 %v416, %v708
      %v711 = vrot.slane %v427, 1
      %v712 = vsel %vm660, %v710, %v711
      %v713 = vor.u32 %v424, %v711
      %v714 = vrot.slane %v435, 1
      %v715 = vsel %vm660, %v713, %v714
      %v716 = vor.u32 %v432, %v714
      %v717 = vrot.slane %v443, 1
      %v718 = vsel %vm660, %v716, %v717
      %v719 = vor.u32 %v440, %v717
      %v720 = vrot.slane %v451, 1
      %v721 = vsel %vm660, %v719, %v720
      %v722 = vor.u32 %v448, %v720
      %v723 = vrot.slane %v459, 1
      %v724 = vsel %vm660, %v722, %v723
      %v725 = vor.u32 %v456, %v723
      %v726 = vrot.slane %v467, 1
      %v727 = vsel %vm660, %v725, %v726
      %v728 = vor.u32 %v464, %v726
      %v729 = vrot.slane %v475, 1
      %v730 = vsel %vm660, %v728, %v729
      %v731 = vor.u32 %v472, %v729
      %732 = vrot.lane.b32.xlu0 %v661, 32
      %v733 = vpop.permute.xlu0 %732
      %734 = vrot.lane.b32.xlu0 %v664, 32
      %v735 = vpop.permute.xlu0 %734
      %736 = vrot.lane.b32.xlu0 %v667, 32
      %v737 = vpop.permute.xlu0 %736
      %738 = vrot.lane.b32.xlu0 %v670, 32
      %v739 = vpop.permute.xlu0 %738
      %740 = vrot.lane.b32.xlu0 %v673, 32
      %v741 = vpop.permute.xlu0 %740
      %742 = vrot.lane.b32.xlu0 %v676, 32
      %v743 = vpop.permute.xlu0 %742
      %744 = vrot.lane.b32.xlu0 %v679, 32
      %v745 = vpop.permute.xlu0 %744
      %746 = vrot.lane.b32.xlu0 %v682, 32
      %v747 = vpop.permute.xlu0 %746
      %748 = vrot.lane.b32.xlu0 %v685, 32
      %v749 = vpop.permute.xlu0 %748
      %750 = vrot.lane.b32.xlu0 %v688, 32
      %v751 = vpop.permute.xlu0 %750
      %752 = vrot.lane.b32.xlu0 %v691, 32
      %v753 = vpop.permute.xlu0 %752
      %754 = vrot.lane.b32.xlu0 %v694, 32
      %v755 = vpop.permute.xlu0 %754
      %756 = vrot.lane.b32.xlu0 %v697, 32
      %v757 = vpop.permute.xlu0 %756
      %758 = vrot.lane.b32.xlu0 %v700, 32
      %v759 = vpop.permute.xlu0 %758
      %760 = vrot.lane.b32.xlu0 %v703, 32
      %v761 = vpop.permute.xlu0 %760
      %762 = vrot.lane.b32.xlu0 %v706, 32
      %v763 = vpop.permute.xlu0 %762
      %764 = vrot.lane.b32.xlu0 %v709, 32
      %v765 = vpop.permute.xlu0 %764
      %766 = vrot.lane.b32.xlu0 %v712, 32
      %v767 = vpop.permute.xlu0 %766
      %768 = vrot.lane.b32.xlu0 %v715, 32
      %v769 = vpop.permute.xlu0 %768
      %770 = vrot.lane.b32.xlu0 %v718, 32
      %v771 = vpop.permute.xlu0 %770
      %772 = vrot.lane.b32.xlu0 %v721, 32
      %v773 = vpop.permute.xlu0 %772
      %774 = vrot.lane.b32.xlu0 %v724, 32
      %v775 = vpop.permute.xlu0 %774
      %776 = vrot.lane.b32.xlu0 %v727, 32
      %v777 = vpop.permute.xlu0 %776
      %778 = vrot.lane.b32.xlu0 %v730, 32
      %v779 = vpop.permute.xlu0 %778
      %780 = vrot.lane.b32.xlu0 %v731, 32
      %v781 = vpop.permute.xlu0 %780
      %vm807 = vcmask 392455
      %vm808 = vmand %vm807, %vm209
      %v809 = vld [vmem:[#allocation2 + $0x8] sm:$0x80]
      %v810 = vsel %vm808, %v733, %v809
      %811 = vst [vmem:[#allocation2 + $0x8] sm:$0x80] %v810
      %vm812 = vcmask 392448
      %813 = vst.msk [vmem:[#allocation2 + $0x10] sm:$0xff] %vm812, %v735
      %814 = vst.msk [vmem:[#allocation2 + $0x18] sm:$0xff] %vm812, %v737
      %815 = vst.msk [vmem:[#allocation2 + $0x20] sm:$0xff] %vm812, %v739
      %816 = vst.msk [vmem:[#allocation2 + $0x28] sm:$0xff] %vm812, %v741
      %817 = vst.msk [vmem:[#allocation2 + $0x30] sm:$0xff] %vm812, %v743
      %818 = vst.msk [vmem:[#allocation2 + $0x38] sm:$0xff] %vm812, %v745
      %819 = vst.msk [vmem:[#allocation2 + $0x40] sm:$0xff] %vm812, %v747
      %820 = vst.msk [vmem:[#allocation2 + $0x48] sm:$0xff] %vm812, %v749
      %821 = vst.msk [vmem:[#allocation2 + $0x50] sm:$0xff] %vm812, %v751
      %822 = vst.msk [vmem:[#allocation2 + $0x58] sm:$0xff] %vm812, %v753
      %823 = vst.msk [vmem:[#allocation2 + $0x60] sm:$0xff] %vm812, %v755
      %824 = vst.msk [vmem:[#allocation2 + $0x68] sm:$0xff] %vm812, %v757
      %825 = vst.msk [vmem:[#allocation2 + $0x70] sm:$0xff] %vm812, %v759
      %826 = vst.msk [vmem:[#allocation2 + $0x78] sm:$0xff] %vm812, %v761
      %827 = vst.msk [vmem:[#allocation2 + $0x80] sm:$0xff] %vm812, %v763
      %828 = vst.msk [vmem:[#allocation2 + $0x88] sm:$0xff] %vm812, %v765
      %829 = vst.msk [vmem:[#allocation2 + $0x90] sm:$0xff] %vm812, %v767
      %830 = vst.msk [vmem:[#allocation2 + $0x98] sm:$0xff] %vm812, %v769
      %831 = vst.msk [vmem:[#allocation2 + $0xa0] sm:$0xff] %vm812, %v771
      %832 = vst.msk [vmem:[#allocation2 + $0xa8] sm:$0xff] %vm812, %v773
      %833 = vst.msk [vmem:[#allocation2 + $0xb0] sm:$0xff] %vm812, %v775
      %834 = vst.msk [vmem:[#allocation2 + $0xb8] sm:$0xff] %vm812, %v777
      %835 = vst.msk [vmem:[#allocation2 + $0xc0] sm:$0xff] %vm812, %v779
      %vm836 = vcmask 392448
      %vm837 = vmand %vm836, %vm660
      %v838 = vld [vmem:[#allocation2 + $0xc8] sm:$0xff]
      %v839 = vsel %vm837, %v781, %v838
      %840 = vst [vmem:[#allocation2 + $0xc8] sm:$0xff] %v839
      %v841 = vld [vmem:[%s3] sm:$0x1]
      %v843 = vlaneseq
      %v844 = vshrl.u32 %v843, 7
      %v845 = vsub.s32 0, %v844
      %v846 = vrot.slane %v841, %v845
      %v848 = vld [vmem:[#allocation2] sm:$0xf0]
      %v849 = vld [vmem:[#allocation2 + $0x8] sm:$0xff]
      %v850 = vld [vmem:[#allocation2 + $0x10] sm:$0xff]
      %v851 = vld [vmem:[#allocation2 + $0x18] sm:$0xff]
      %v852 = vld [vmem:[#allocation2 + $0x20] sm:$0xff]
      %v853 = vld [vmem:[#allocation2 + $0x28] sm:$0xff]
      %v854 = vld [vmem:[#allocation2 + $0x30] sm:$0xff]
      %v855 = vld [vmem:[#allocation2 + $0x38] sm:$0xff]
      %v856 = vld [vmem:[#allocation2 + $0x40] sm:$0xf]
      %v857 = vld [vmem:[%s2] sm:$0xf]
      %v858 = vld [vmem:[%s2 + $0x4] sm:$0xf]
      %v859 = vld [vmem:[%s2 + $0x8] sm:$0xf]
      %v860 = vld [vmem:[%s2 + $0xc] sm:$0xf]
      %v861 = vld [vmem:[%s2 + $0x10] sm:$0xf]
      %v862 = vld [vmem:[%s2 + $0x14] sm:$0xf]
      %vm872 = vcmask 1043456
      %v873 = vrot.slane %v848, 4
      %v874 = vrot.slane %v849, 4
      %v875 = vsel %vm872, %v873, %v874
      %v876 = vrot.slane %v850, 4
      %v877 = vsel %vm872, %v874, %v876
      %v878 = vrot.slane %v851, 4
      %v879 = vsel %vm872, %v876, %v878
      %v880 = vrot.slane %v852, 4
      %v881 = vsel %vm872, %v878, %v880
      %v882 = vrot.slane %v853, 4
      %v883 = vsel %vm872, %v880, %v882
      %v884 = vrot.slane %v854, 4
      %v885 = vsel %vm872, %v882, %v884
      %v886 = vrot.slane %v855, 4
      %v887 = vsel %vm872, %v884, %v886
      %v888 = vrot.slane %v856, 4
      %v889 = vsel %vm872, %v886, %v888
      %v896 = vunpack.c.l.b16 %v857
      %v897 = vunpack.c.l.b16 %v858
      %v898 = vunpack.c.l.b16 %v859
      %v899 = vunpack.c.l.b16 %v860
      %v900 = vunpack.c.l.b16 %v861
      %v901 = vunpack.c.l.b16 %v862
      %v902 = vpack.c.b16 %v897, %v896
      %v903 = vpack.c.b16 %v899, %v898
      %v904 = vpack.c.b16 %v901, %v900
      %v909 = vsel %vm199, %v875, 0
      %v912 = vsel %vm199, %v877, 0
      %v915 = vsel %vm199, %v879, 0
      %v918 = vsel %vm199, %v881, 0
      %v921 = vsel %vm199, %v883, 0
      %v924 = vsel %vm199, %v885, 0
      %v927 = vsel %vm199, %v887, 0
      %v930 = vsel %vm199, %v889, 0
      %932 = vmatprep.subr.bf16.mxu0 0
      %933 = vmatpush1.bf16.msra.mxu0 %v902
      %934 = vmatprep.subr.bf16.mxu0 0
      %935 = vmatpush1.bf16.msra.mxu0 %v903
      %936 = vmatprep.subr.bf16.mxu0 0
      %937 = vmatpush1.bf16.msra.mxu0 %v904
      %938 = vmatprep.subr.bf16.mxu0 0
      %939 = vmatpush1.bf16.msra.mxu0 0
      %940 = vmatprep.subr.bf16.mxu0 0
      %941 = vmatpush1.bf16.msra.mxu0 0
      %942 = vmatprep.subr.bf16.mxu0 0
      %943 = vmatpush1.bf16.msra.mxu0 0
      %944 = vmatprep.subr.bf16.mxu0 0
      %945 = vmatpush1.bf16.msra.mxu0 0
      %946 = vmatprep.subr.bf16.mxu0 0
      %947 = vmatpush1.bf16.msra.mxu0 0
      %948 = vmatprep.subr.bf16.mxu0 0
      %949 = vmatpush1.bf16.msra.mxu0 0
      %950 = vmatprep.subr.bf16.mxu0 0
      %951 = vmatpush1.bf16.msra.mxu0 0
      %952 = vmatprep.subr.bf16.mxu0 0
      %953 = vmatpush1.bf16.msra.mxu0 0
      %954 = vmatprep.subr.bf16.mxu0 0
      %955 = vmatpush1.bf16.msra.mxu0 0
      %956 = vmatprep.subr.bf16.mxu0 0
      %957 = vmatpush1.bf16.msra.mxu0 0
      %958 = vmatprep.subr.bf16.mxu0 0
      %959 = vmatpush1.bf16.msra.mxu0 0
      %960 = vmatprep.subr.bf16.mxu0 0
      %961 = vmatpush1.bf16.msra.mxu0 0
      %962 = vmatprep.subr.bf16.mxu0 0
      %963 = vmatpush1.bf16.msra.mxu0 0
      %964 = vmatprep.mubr.bf16.mxu0 0
      %965 = vmatmul.mubr.bf16.gmra.mrb[0].mxu0 %v909
      %v966 = vpop.f32.mrb[0].mxu0
      %v967 = vadd.f32 0.0, %v966
      %v968 = vpop.f32.mrb[0].mxu0
      %v969 = vpop.f32.mrb[0].mxu0
      %v970 = vadd.f32 0.0, %v969
      %v971 = vpop.f32.mrb[0].mxu0
      %972 = vmatprep.mubr.bf16.mxu0 0
      %973 = vmatmul.mubr.bf16.gmra.mrb[0].mxu0 %v912
      %v974 = vpop.f32.mrb[0].mxu0
      %v975 = vadd.f32 0.0, %v974
      %v976 = vpop.f32.mrb[0].mxu0
      %v977 = vpop.f32.mrb[0].mxu0
      %v978 = vadd.f32 0.0, %v977
      %v979 = vpop.f32.mrb[0].mxu0
      %980 = vmatprep.mubr.bf16.mxu0 0
      %981 = vmatmul.mubr.bf16.gmra.mrb[0].mxu0 %v915
      %v982 = vpop.f32.mrb[0].mxu0
      %v983 = vadd.f32 0.0, %v982
      %v984 = vpop.f32.mrb[0].mxu0
      %v985 = vpop.f32.mrb[0].mxu0
      %v986 = vadd.f32 0.0, %v985
      %v987 = vpop.f32.mrb[0].mxu0
      %988 = vmatprep.mubr.bf16.mxu0 0
      %989 = vmatmul.mubr.bf16.gmra.mrb[0].mxu0 %v918
      %v990 = vpop.f32.mrb[0].mxu0
      %v991 = vadd.f32 0.0, %v990
      %v992 = vpop.f32.mrb[0].mxu0
      %v993 = vpop.f32.mrb[0].mxu0
      %v994 = vadd.f32 0.0, %v993
      %v995 = vpop.f32.mrb[0].mxu0
      %996 = vmatprep.mubr.bf16.mxu0 0
      %997 = vmatmul.mubr.bf16.gmra.mrb[0].mxu0 %v921
      %v998 = vpop.f32.mrb[0].mxu0
      %v999 = vadd.f32 0.0, %v998
      %v1000 = vpop.f32.mrb[0].mxu0
      %v1001 = vpop.f32.mrb[0].mxu0
      %v1002 = vadd.f32 0.0, %v1001
      %v1003 = vpop.f32.mrb[0].mxu0
      %1004 = vmatprep.mubr.bf16.mxu0 0
      %1005 = vmatmul.mubr.bf16.gmra.mrb[0].mxu0 %v924
      %v1006 = vpop.f32.mrb[0].mxu0
      %v1007 = vadd.f32 0.0, %v1006
      %v1008 = vpop.f32.mrb[0].mxu0
      %v1009 = vpop.f32.mrb[0].mxu0
      %v1010 = vadd.f32 0.0, %v1009
      %v1011 = vpop.f32.mrb[0].mxu0
      %1012 = vmatprep.mubr.bf16.mxu0 0
      %1013 = vmatmul.mubr.bf16.gmra.mrb[0].mxu0 %v927
      %v1014 = vpop.f32.mrb[0].mxu0
      %v1015 = vadd.f32 0.0, %v1014
      %v1016 = vpop.f32.mrb[0].mxu0
      %v1017 = vpop.f32.mrb[0].mxu0
      %v1018 = vadd.f32 0.0, %v1017
      %v1019 = vpop.f32.mrb[0].mxu0
      %1020 = vmatprep.mubr.bf16.mxu0 0
      %1021 = vmatmul.mubr.bf16.gmra.mrb[0].mxu0 %v930
      %v1022 = vpop.f32.mrb[0].mxu0
      %v1023 = vadd.f32 0.0, %v1022
      %v1024 = vpop.f32.mrb[0].mxu0
      %v1025 = vpop.f32.mrb[0].mxu0
      %v1026 = vadd.f32 0.0, %v1025
      %v1027 = vpop.f32.mrb[0].mxu0
      %1028 = vdwg.mxu0
      %v1029 = vadd.f32 %v846, %v967
      %v1030 = vadd.f32 %v846, %v970
      %v1031 = vadd.f32 %v846, %v975
      %v1032 = vadd.f32 %v846, %v978
      %v1033 = vadd.f32 %v846, %v983
      %v1034 = vadd.f32 %v846, %v986
      %v1035 = vadd.f32 %v846, %v991
      %v1036 = vadd.f32 %v846, %v994
      %v1037 = vadd.f32 %v846, %v999
      %v1038 = vadd.f32 %v846, %v1002
      %v1039 = vadd.f32 %v846, %v1007
      %v1040 = vadd.f32 %v846, %v1010
      %v1041 = vadd.f32 %v846, %v1015
      %v1042 = vadd.f32 %v846, %v1018
      %v1043 = vadd.f32 %v846, %v1023
      %v1044 = vadd.f32 %v846, %v1026
      %v1045 = vld [vmem:[#allocation2 + $0x10] sm:$0xff]
      %v1046 = vld [vmem:[#allocation2 + $0x18] sm:$0xff]
      %v1047 = vld [vmem:[#allocation2 + $0x20] sm:$0xff]
      %v1048 = vld [vmem:[#allocation2 + $0x28] sm:$0xff]
      %v1049 = vld [vmem:[#allocation2 + $0x30] sm:$0xff]
      %v1050 = vld [vmem:[#allocation2 + $0x38] sm:$0xff]
      %v1051 = vld [vmem:[#allocation2 + $0x40] sm:$0xff]
      %v1052 = vld [vmem:[#allocation2 + $0x48] sm:$0xff]
      %s1053 = scalar_lea.vmem %s2, 24
      %v1054 = vld [vmem:[%s1053] sm:$0xf]
      %v1055 = vld [vmem:[%s1053 + $0x4] sm:$0xf]
      %v1056 = vld [vmem:[%s1053 + $0x8] sm:$0xf]
      %v1057 = vld [vmem:[%s1053 + $0xc] sm:$0xf]
      %v1058 = vld [vmem:[%s1053 + $0x10] sm:$0xf]
      %v1059 = vld [vmem:[%s1053 + $0x14] sm:$0xf]
      %v1066 = vunpack.c.l.b16 %v1054
      %v1067 = vunpack.c.l.b16 %v1055
      %v1068 = vunpack.c.l.b16 %v1056
      %v1069 = vunpack.c.l.b16 %v1057
      %v1070 = vunpack.c.l.b16 %v1058
      %v1071 = vunpack.c.l.b16 %v1059
      %v1072 = vpack.c.b16 %v1067, %v1066
      %v1073 = vpack.c.b16 %v1069, %v1068
      %v1074 = vpack.c.b16 %v1071, %v1070
      %v1079 = vsel %vm199, %v1045, 0
      %v1082 = vsel %vm199, %v1046, 0
      %v1085 = vsel %vm199, %v1047, 0
      %v1088 = vsel %vm199, %v1048, 0
      %v1091 = vsel %vm199, %v1049, 0
      %v1094 = vsel %vm199, %v1050, 0
      %v1097 = vsel %vm199, %v1051, 0
      %v1100 = vsel %vm199, %v1052, 0
      %1102 = vmatprep.subr.bf16.mxu0 0
      %1103 = vmatpush1.bf16.msra.mxu0 %v1072
      %1104 = vmatprep.subr.bf16.mxu0 0
      %1105 = vmatpush1.bf16.msra.mxu0 %v1073
      %1106 = vmatprep.subr.bf16.mxu0 0
      %1107 = vmatpush1.bf16.msra.mxu0 %v1074
      %1108 = vmatprep.subr.bf16.mxu0 0
      %1109 = vmatpush1.bf16.msra.mxu0 0
      %1110 = vmatprep.subr.bf16.mxu0 0
      %1111 = vmatpush1.bf16.msra.mxu0 0
      %1112 = vmatprep.subr.bf16.mxu0 0
      %1113 = vmatpush1.bf16.msra.mxu0 0
      %1114 = vmatprep.subr.bf16.mxu0 0
      %1115 = vmatpush1.bf16.msra.mxu0 0
      %1116 = vmatprep.subr.bf16.mxu0 0
      %1117 = vmatpush1.bf16.msra.mxu0 0
      %1118 = vmatprep.subr.bf16.mxu0 0
      %1119 = vmatpush1.bf16.msra.mxu0 0
      %1120 = vmatprep.subr.bf16.mxu0 0
      %1121 = vmatpush1.bf16.msra.mxu0 0
      %1122 = vmatprep.subr.bf16.mxu0 0
      %1123 = vmatpush1.bf16.msra.mxu0 0
      %1124 = vmatprep.subr.bf16.mxu0 0
      %1125 = vmatpush1.bf16.msra.mxu0 0
      %1126 = vmatprep.subr.bf16.mxu0 0
      %1127 = vmatpush1.bf16.msra.mxu0 0
      %1128 = vmatprep.subr.bf16.mxu0 0
      %1129 = vmatpush1.bf16.msra.mxu0 0
      %1130 = vmatprep.subr.bf16.mxu0 0
      %1131 = vmatpush1.bf16.msra.mxu0 0
      %1132 = vmatprep.subr.bf16.mxu0 0
      %1133 = vmatpush1.bf16.msra.mxu0 0
      %1134 = vmatprep.mubr.bf16.mxu0 0
      %1135 = vmatmul.mubr.bf16.gmra.mrb[0].mxu0 %v1079
      %v1136 = vpop.f32.mrb[0].mxu0
      %v1137 = vadd.f32 0.0, %v1136
      %v1138 = vpop.f32.mrb[0].mxu0
      %v1139 = vpop.f32.mrb[0].mxu0
      %v1140 = vadd.f32 0.0, %v1139
      %v1141 = vpop.f32.mrb[0].mxu0
      %1142 = vmatprep.mubr.bf16.mxu0 0
      %1143 = vmatmul.mubr.bf16.gmra.mrb[0].mxu0 %v1082
      %v1144 = vpop.f32.mrb[0].mxu0
      %v1145 = vadd.f32 0.0, %v1144
      %v1146 = vpop.f32.mrb[0].mxu0
      %v1147 = vpop.f32.mrb[0].mxu0
      %v1148 = vadd.f32 0.0, %v1147
      %v1149 = vpop.f32.mrb[0].mxu0
      %1150 = vmatprep.mubr.bf16.mxu0 0
      %1151 = vmatmul.mubr.bf16.gmra.mrb[0].mxu0 %v1085
      %v1152 = vpop.f32.mrb[0].mxu0
      %v1153 = vadd.f32 0.0, %v1152
      %v1154 = vpop.f32.mrb[0].mxu0
      %v1155 = vpop.f32.mrb[0].mxu0
      %v1156 = vadd.f32 0.0, %v1155
      %v1157 = vpop.f32.mrb[0].mxu0
      %1158 = vmatprep.mubr.bf16.mxu0 0
      %1159 = vmatmul.mubr.bf16.gmra.mrb[0].mxu0 %v1088
      %v1160 = vpop.f32.mrb[0].mxu0
      %v1161 = vadd.f32 0.0, %v1160
      %v1162 = vpop.f32.mrb[0].mxu0
      %v1163 = vpop.f32.mrb[0].mxu0
      %v1164 = vadd.f32 0.0, %v1163
      %v1165 = vpop.f32.mrb[0].mxu0
      %1166 = vmatprep.mubr.bf16.mxu0 0
      %1167 = vmatmul.mubr.bf16.gmra.mrb[0].mxu0 %v1091
      %v1168 = vpop.f32.mrb[0].mxu0
      %v1169 = vadd.f32 0.0, %v1168
      %v1170 = vpop.f32.mrb[0].mxu0
      %v1171 = vpop.f32.mrb[0].mxu0
      %v1172 = vadd.f32 0.0, %v1171
      %v1173 = vpop.f32.mrb[0].mxu0
      %1174 = vmatprep.mubr.bf16.mxu0 0
      %1175 = vmatmul.mubr.bf16.gmra.mrb[0].mxu0 %v1094
      %v1176 = vpop.f32.mrb[0].mxu0
      %v1177 = vadd.f32 0.0, %v1176
      %v1178 = vpop.f32.mrb[0].mxu0
      %v1179 = vpop.f32.mrb[0].mxu0
      %v1180 = vadd.f32 0.0, %v1179
      %v1181 = vpop.f32.mrb[0].mxu0
      %1182 = vmatprep.mubr.bf16.mxu0 0
      %1183 = vmatmul.mubr.bf16.gmra.mrb[0].mxu0 %v1097
      %v1184 = vpop.f32.mrb[0].mxu0
      %v1185 = vadd.f32 0.0, %v1184
      %v1186 = vpop.f32.mrb[0].mxu0
      %v1187 = vpop.f32.mrb[0].mxu0
      %v1188 = vadd.f32 0.0, %v1187
      %v1189 = vpop.f32.mrb[0].mxu0
      %1190 = vmatprep.mubr.bf16.mxu0 0
      %1191 = vmatmul.mubr.bf16.gmra.mrb[0].mxu0 %v1100
      %v1192 = vpop.f32.mrb[0].mxu0
      %v1193 = vadd.f32 0.0, %v1192
      %v1194 = vpop.f32.mrb[0].mxu0
      %v1195 = vpop.f32.mrb[0].mxu0
      %v1196 = vadd.f32 0.0, %v1195
      %v1197 = vpop.f32.mrb[0].mxu0
      %1198 = vdwg.mxu0
      %v1199 = vadd.f32 %v1029, %v1137
      %v1200 = vadd.f32 %v1030, %v1140
      %v1201 = vadd.f32 %v1031, %v1145
      %v1202 = vadd.f32 %v1032, %v1148
      %v1203 = vadd.f32 %v1033, %v1153
      %v1204 = vadd.f32 %v1034, %v1156
      %v1205 = vadd.f32 %v1035, %v1161
      %v1206 = vadd.f32 %v1036, %v1164
      %v1207 = vadd.f32 %v1037, %v1169
      %v1208 = vadd.f32 %v1038, %v1172
      %v1209 = vadd.f32 %v1039, %v1177
      %v1210 = vadd.f32 %v1040, %v1180
      %v1211 = vadd.f32 %v1041, %v1185
      %v1212 = vadd.f32 %v1042, %v1188
      %v1213 = vadd.f32 %v1043, %v1193
      %v1214 = vadd.f32 %v1044, %v1196
      %v1215 = vld [vmem:[#allocation2 + $0x18] sm:$0xf0]
      %v1216 = vld [vmem:[#allocation2 + $0x20] sm:$0xff]
      %v1217 = vld [vmem:[#allocation2 + $0x28] sm:$0xff]
      %v1218 = vld [vmem:[#allocation2 + $0x30] sm:$0xff]
      %v1219 = vld [vmem:[#allocation2 + $0x38] sm:$0xff]
      %v1220 = vld [vmem:[#allocation2 + $0x40] sm:$0xff]
      %v1221 = vld [vmem:[#allocation2 + $0x48] sm:$0xff]
      %v1222 = vld [vmem:[#allocation2 + $0x50] sm:$0xff]
      %v1223 = vld [vmem:[#allocation2 + $0x58] sm:$0xf]
      %s1224 = scalar_lea.vmem %s2, 48
      %v1225 = vld [vmem:[%s1224] sm:$0xf]
      %v1226 = vld [vmem:[%s1224 + $0x4] sm:$0xf]
      %v1227 = vld [vmem:[%s1224 + $0x8] sm:$0xf]
      %v1228 = vld [vmem:[%s1224 + $0xc] sm:$0xf]
      %v1229 = vld [vmem:[%s1224 + $0x10] sm:$0xf]
      %v1230 = vld [vmem:[%s1224 + $0x14] sm:$0xf]
      %v1240 = vrot.slane %v1215, 4
      %v1241 = vrot.slane %v1216, 4
      %v1242 = vsel %vm872, %v1240, %v1241
      %v1243 = vrot.slane %v1217, 4
      %v1244 = vsel %vm872, %v1241, %v1243
      %v1245 = vrot.slane %v1218, 4
      %v1246 = vsel %vm872, %v1243, %v1245
      %v1247 = vrot.slane %v1219, 4
      %v1248 = vsel %vm872, %v1245, %v1247
      %v1249 = vrot.slane %v1220, 4
      %v1250 = vsel %vm872, %v1247, %v1249
      %v1251 = vrot.slane %v1221, 4
      %v1252 = vsel %vm872, %v1249, %v1251
      %v1253 = vrot.slane %v1222, 4
      %v1254 = vsel %vm872, %v1251, %v1253
      %v1255 = vrot.slane %v1223, 4
      %v1256 = vsel %vm872, %v1253, %v1255
      %v1263 = vunpack.c.l.b16 %v1225
      %v1264 = vunpack.c.l.b16 %v1226
      %v1265 = vunpack.c.l.b16 %v1227
      %v1266 = vunpack.c.l.b16 %v1228
      %v1267 = vunpack.c.l.b16 %v1229
      %v1268 = vunpack.c.l.b16 %v1230
      %v1269 = vpack.c.b16 %v1264, %v1263
      %v1270 = vpack.c.b16 %v1266, %v1265
      %v1271 = vpack.c.b16 %v1268, %v1267
      %v1276 = vsel %vm199, %v1242, 0
      %v1279 = vsel %vm199, %v1244, 0
      %v1282 = vsel %vm199, %v1246, 0
      %v1285 = vsel %vm199, %v1248, 0
      %v1288 = vsel %vm199, %v1250, 0
      %v1291 = vsel %vm199, %v1252, 0
      %v1294 = vsel %vm199, %v1254, 0
      %v1297 = vsel %vm199, %v1256, 0
      %1299 = vmatprep.subr.bf16.mxu0 0
      %1300 = vmatpush1.bf16.msra.mxu0 %v1269
      %1301 = vmatprep.subr.bf16.mxu0 0
      %1302 = vmatpush1.bf16.msra.mxu0 %v1270
      %1303 = vmatprep.subr.bf16.mxu0 0
      %1304 = vmatpush1.bf16.msra.mxu0 %v1271
      %1305 = vmatprep.subr.bf16.mxu0 0
      %1306 = vmatpush1.bf16.msra.mxu0 0
      %1307 = vmatprep.subr.bf16.mxu0 0
      %1308 = vmatpush1.bf16.msra.mxu0 0
      %1309 = vmatprep.subr.bf16.mxu0 0
      %1310 = vmatpush1.bf16.msra.mxu0 0
      %1311 = vmatprep.subr.bf16.mxu0 0
      %1312 = vmatpush1.bf16.msra.mxu0 0
      %1313 = vmatprep.subr.bf16.mxu0 0
      %1314 = vmatpush1.bf16.msra.mxu0 0
      %1315 = vmatprep.subr.bf16.mxu0 0
      %1316 = vmatpush1.bf16.msra.mxu0 0
      %1317 = vmatprep.subr.bf16.mxu0 0
      %1318 = vmatpush1.bf16.msra.mxu0 0
      %1319 = vmatprep.subr.bf16.mxu0 0
      %1320 = vmatpush1.bf16.msra.mxu0 0
      %1321 = vmatprep.subr.bf16.mxu0 0
      %1322 = vmatpush1.bf16.msra.mxu0 0
      %1323 = vmatprep.subr.bf16.mxu0 0
      %1324 = vmatpush1.bf16.msra.mxu0 0
      %1325 = vmatprep.subr.bf16.mxu0 0
      %1326 = vmatpush1.bf16.msra.mxu0 0
      %1327 = vmatprep.subr.bf16.mxu0 0
      %1328 = vmatpush1.bf16.msra.mxu0 0
      %1329 = vmatprep.subr.bf16.mxu0 0
      %1330 = vmatpush1.bf16.msra.mxu0 0
      %1331 = vmatprep.mubr.bf16.mxu0 0
      %1332 = vmatmul.mubr.bf16.gmra.mrb[0].mxu0 %v1276
      %v1333 = vpop.f32.mrb[0].mxu0
      %v1334 = vadd.f32 0.0, %v1333
      %v1335 = vpop.f32.mrb[0].mxu0
      %v1336 = vpop.f32.mrb[0].mxu0
      %v1337 = vadd.f32 0.0, %v1336
      %v1338 = vpop.f32.mrb[0].mxu0
      %1339 = vmatprep.mubr.bf16.mxu0 0
      %1340 = vmatmul.mubr.bf16.gmra.mrb[0].mxu0 %v1279
      %v1341 = vpop.f32.mrb[0].mxu0
      %v1342 = vadd.f32 0.0, %v1341
      %v1343 = vpop.f32.mrb[0].mxu0
      %v1344 = vpop.f32.mrb[0].mxu0
      %v1345 = vadd.f32 0.0, %v1344
      %v1346 = vpop.f32.mrb[0].mxu0
      %1347 = vmatprep.mubr.bf16.mxu0 0
      %1348 = vmatmul.mubr.bf16.gmra.mrb[0].mxu0 %v1282
      %v1349 = vpop.f32.mrb[0].mxu0
      %v1350 = vadd.f32 0.0, %v1349
      %v1351 = vpop.f32.mrb[0].mxu0
      %v1352 = vpop.f32.mrb[0].mxu0
      %v1353 = vadd.f32 0.0, %v1352
      %v1354 = vpop.f32.mrb[0].mxu0
      %1355 = vmatprep.mubr.bf16.mxu0 0
      %1356 = vmatmul.mubr.bf16.gmra.mrb[0].mxu0 %v1285
      %v1357 = vpop.f32.mrb[0].mxu0
      %v1358 = vadd.f32 0.0, %v1357
      %v1359 = vpop.f32.mrb[0].mxu0
      %v1360 = vpop.f32.mrb[0].mxu0
      %v1361 = vadd.f32 0.0, %v1360
      %v1362 = vpop.f32.mrb[0].mxu0
      %1363 = vmatprep.mubr.bf16.mxu0 0
      %1364 = vmatmul.mubr.bf16.gmra.mrb[0].mxu0 %v1288
      %v1365 = vpop.f32.mrb[0].mxu0
      %v1366 = vadd.f32 0.0, %v1365
      %v1367 = vpop.f32.mrb[0].mxu0
      %v1368 = vpop.f32.mrb[0].mxu0
      %v1369 = vadd.f32 0.0, %v1368
      %v1370 = vpop.f32.mrb[0].mxu0
      %1371 = vmatprep.mubr.bf16.mxu0 0
      %1372 = vmatmul.mubr.bf16.gmra.mrb[0].mxu0 %v1291
      %v1373 = vpop.f32.mrb[0].mxu0
      %v1374 = vadd.f32 0.0, %v1373
      %v1375 = vpop.f32.mrb[0].mxu0
      %v1376 = vpop.f32.mrb[0].mxu0
      %v1377 = vadd.f32 0.0, %v1376
      %v1378 = vpop.f32.mrb[0].mxu0
      %1379 = vmatprep.mubr.bf16.mxu0 0
      %1380 = vmatmul.mubr.bf16.gmra.mrb[0].mxu0 %v1294
      %v1381 = vpop.f32.mrb[0].mxu0
      %v1382 = vadd.f32 0.0, %v1381
      %v1383 = vpop.f32.mrb[0].mxu0
      %v1384 = vpop.f32.mrb[0].mxu0
      %v1385 = vadd.f32 0.0, %v1384
      %v1386 = vpop.f32.mrb[0].mxu0
      %1387 = vmatprep.mubr.bf16.mxu0 0
      %1388 = vmatmul.mubr.bf16.gmra.mrb[0].mxu0 %v1297
      %v1389 = vpop.f32.mrb[0].mxu0
      %v1390 = vadd.f32 0.0, %v1389
      %v1391 = vpop.f32.mrb[0].mxu0
      %v1392 = vpop.f32.mrb[0].mxu0
      %v1393 = vadd.f32 0.0, %v1392
      %v1394 = vpop.f32.mrb[0].mxu0
      %1395 = vdwg.mxu0
      %v1396 = vadd.f32 %v1199, %v1334
      %v1397 = vadd.f32 %v1200, %v1337
      %v1398 = vadd.f32 %v1201, %v1342
      %v1399 = vadd.f32 %v1202, %v1345
      %v1400 = vadd.f32 %v1203, %v1350
      %v1401 = vadd.f32 %v1204, %v1353
      %v1402 = vadd.f32 %v1205, %v1358
      %v1403 = vadd.f32 %v1206, %v1361
      %v1404 = vadd.f32 %v1207, %v1366
      %v1405 = vadd.f32 %v1208, %v1369
      %v1406 = vadd.f32 %v1209, %v1374
      %v1407 = vadd.f32 %v1210, %v1377
      %v1408 = vadd.f32 %v1211, %v1382
      %v1409 = vadd.f32 %v1212, %v1385
      %v1410 = vadd.f32 %v1213, %v1390
      %v1411 = vadd.f32 %v1214, %v1393
      %v1412 = vld [vmem:[%s1] sm:$0xff]
      %v1413 = vld [vmem:[%s1 + $0x8] sm:$0xff]
      %v1414 = vld [vmem:[%s1 + $0x10] sm:$0xff]
      %v1415 = vld [vmem:[%s1 + $0x18] sm:$0xff]
      %v1416 = vld [vmem:[%s1 + $0x20] sm:$0xff]
      %v1417 = vld [vmem:[%s1 + $0x28] sm:$0xff]
      %v1418 = vld [vmem:[%s1 + $0x30] sm:$0xff]
      %v1419 = vld [vmem:[%s1 + $0x38] sm:$0xff]
      %v1420 = vld [vmem:[%s1 + $0x40] sm:$0xff]
      %v1421 = vld [vmem:[%s1 + $0x48] sm:$0xff]
      %v1422 = vld [vmem:[%s1 + $0x50] sm:$0xff]
      %v1423 = vld [vmem:[%s1 + $0x58] sm:$0xff]
      %v1424 = vld [vmem:[%s1 + $0x60] sm:$0xff]
      %v1425 = vld [vmem:[%s1 + $0x68] sm:$0xff]
      %v1426 = vld [vmem:[%s1 + $0x70] sm:$0xff]
      %v1427 = vld [vmem:[%s1 + $0x78] sm:$0xff]
      %1429 = vset.pattern.permute.xlu0 0
      %1430 = vperm.xlu0 %1429, %v1412
      %v1431 = vpop.permute.xlu0 %1430
      %1434 = vset.pattern.permute.xlu0 0
      %1435 = vperm.xlu0 %1434, %v1413
      %v1436 = vpop.permute.xlu0 %1435
      %1439 = vset.pattern.permute.xlu0 0
      %1440 = vperm.xlu0 %1439, %v1414
      %v1441 = vpop.permute.xlu0 %1440
      %1444 = vset.pattern.permute.xlu0 0
      %1445 = vperm.xlu0 %1444, %v1415
      %v1446 = vpop.permute.xlu0 %1445
      %1449 = vset.pattern.permute.xlu0 0
      %1450 = vperm.xlu0 %1449, %v1416
      %v1451 = vpop.permute.xlu0 %1450
      %1454 = vset.pattern.permute.xlu0 0
      %1455 = vperm.xlu0 %1454, %v1417
      %v1456 = vpop.permute.xlu0 %1455
      %1459 = vset.pattern.permute.xlu0 0
      %1460 = vperm.xlu0 %1459, %v1418
      %v1461 = vpop.permute.xlu0 %1460
      %1464 = vset.pattern.permute.xlu0 0
      %1465 = vperm.xlu0 %1464, %v1419
      %v1466 = vpop.permute.xlu0 %1465
      %1469 = vset.pattern.permute.xlu0 0
      %1470 = vperm.xlu0 %1469, %v1420
      %v1471 = vpop.permute.xlu0 %1470
      %1474 = vset.pattern.permute.xlu0 0
      %1475 = vperm.xlu0 %1474, %v1421
      %v1476 = vpop.permute.xlu0 %1475
      %1479 = vset.pattern.permute.xlu0 0
      %1480 = vperm.xlu0 %1479, %v1422
      %v1481 = vpop.permute.xlu0 %1480
      %1484 = vset.pattern.permute.xlu0 0
      %1485 = vperm.xlu0 %1484, %v1423
      %v1486 = vpop.permute.xlu0 %1485
      %1489 = vset.pattern.permute.xlu0 0
      %1490 = vperm.xlu0 %1489, %v1424
      %v1491 = vpop.permute.xlu0 %1490
      %1494 = vset.pattern.permute.xlu0 0
      %1495 = vperm.xlu0 %1494, %v1425
      %v1496 = vpop.permute.xlu0 %1495
      %1499 = vset.pattern.permute.xlu0 0
      %1500 = vperm.xlu0 %1499, %v1426
      %v1501 = vpop.permute.xlu0 %1500
      %1504 = vset.pattern.permute.xlu0 0
      %1505 = vperm.xlu0 %1504, %v1427
      %v1506 = vpop.permute.xlu0 %1505
      %v1508 = vmul.f32 %v1396, %v1431
      %v1509 = vmul.f32 %v1397, %v1436
      %v1510 = vmul.f32 %v1398, %v1441
      %v1511 = vmul.f32 %v1399, %v1446
      %v1512 = vmul.f32 %v1400, %v1451
      %v1513 = vmul.f32 %v1401, %v1456
      %v1514 = vmul.f32 %v1402, %v1461
      %v1515 = vmul.f32 %v1403, %v1466
      %v1516 = vmul.f32 %v1404, %v1471
      %v1517 = vmul.f32 %v1405, %v1476
      %v1518 = vmul.f32 %v1406, %v1481
      %v1519 = vmul.f32 %v1407, %v1486
      %v1520 = vmul.f32 %v1408, %v1491
      %v1521 = vmul.f32 %v1409, %v1496
      %v1522 = vmul.f32 %v1410, %v1501
      %v1523 = vmul.f32 %v1411, %v1506
      %1524 = vst.msk [vmem:[%s197] sm:$0xff] %vm510, %v1508
      %1525 = vst.msk [vmem:[%s197 + $0x8] sm:$0xff] %vm510, %v1509
      %1526 = vst.msk [vmem:[%s197 + $0x10] sm:$0xff] %vm510, %v1510
      %1527 = vst.msk [vmem:[%s197 + $0x18] sm:$0xff] %vm510, %v1511
      %1528 = vst.msk [vmem:[%s197 + $0x20] sm:$0xff] %vm510, %v1512
      %1529 = vst.msk [vmem:[%s197 + $0x28] sm:$0xff] %vm510, %v1513
      %1530 = vst.msk [vmem:[%s197 + $0x30] sm:$0xff] %vm510, %v1514
      %1531 = vst.msk [vmem:[%s197 + $0x38] sm:$0xff] %vm510, %v1515
      %1532 = vst.msk [vmem:[%s197 + $0x40] sm:$0xff] %vm510, %v1516
      %1533 = vst.msk [vmem:[%s197 + $0x48] sm:$0xff] %vm510, %v1517
      %1534 = vst.msk [vmem:[%s197 + $0x50] sm:$0xff] %vm510, %v1518
      %1535 = vst.msk [vmem:[%s197 + $0x58] sm:$0xff] %vm510, %v1519
      %1536 = vst.msk [vmem:[%s197 + $0x60] sm:$0xff] %vm510, %v1520
      %1537 = vst.msk [vmem:[%s197 + $0x68] sm:$0xff] %vm510, %v1521
      %1538 = vst.msk [vmem:[%s197 + $0x70] sm:$0xff] %vm510, %v1522
      %1539 = vst.msk [vmem:[%s197 + $0x78] sm:$0xff] %vm510, %v1523
      %v1540 = vld [vmem:[#allocation2 + $0x40] sm:$0xf0]
      %v1541 = vld [vmem:[#allocation2 + $0x48] sm:$0xff]
      %v1542 = vld [vmem:[#allocation2 + $0x50] sm:$0xff]
      %v1543 = vld [vmem:[#allocation2 + $0x58] sm:$0xff]
      %v1544 = vld [vmem:[#allocation2 + $0x60] sm:$0xff]
      %v1545 = vld [vmem:[#allocation2 + $0x68] sm:$0xff]
      %v1546 = vld [vmem:[#allocation2 + $0x70] sm:$0xff]
      %v1547 = vld [vmem:[#allocation2 + $0x78] sm:$0xff]
      %v1548 = vld [vmem:[#allocation2 + $0x80] sm:$0xf]
      %v1549 = vld [vmem:[%s2] sm:$0xf]
      %v1550 = vld [vmem:[%s2 + $0x4] sm:$0xf]
      %v1551 = vld [vmem:[%s2 + $0x8] sm:$0xf]
      %v1552 = vld [vmem:[%s2 + $0xc] sm:$0xf]
      %v1553 = vld [vmem:[%s2 + $0x10] sm:$0xf]
      %v1554 = vld [vmem:[%s2 + $0x14] sm:$0xf]
      %v1564 = vrot.slane %v1540, 4
      %v1565 = vrot.slane %v1541, 4
      %v1566 = vsel %vm872, %v1564, %v1565
      %v1567 = vrot.slane %v1542, 4
      %v1568 = vsel %vm872, %v1565, %v1567
      %v1569 = vrot.slane %v1543, 4
      %v1570 = vsel %vm872, %v1567, %v1569
      %v1571 = vrot.slane %v1544, 4
      %v1572 = vsel %vm872, %v1569, %v1571
      %v1573 = vrot.slane %v1545, 4
      %v1574 = vsel %vm872, %v1571, %v1573
      %v1575 = vrot.slane %v1546, 4
      %v1576 = vsel %vm872, %v1573, %v1575
      %v1577 = vrot.slane %v1547, 4
      %v1578 = vsel %vm872, %v1575, %v1577
      %v1579 = vrot.slane %v1548, 4
      %v1580 = vsel %vm872, %v1577, %v1579
      %v1587 = vunpack.c.l.b16 %v1549
      %v1588 = vunpack.c.l.b16 %v1550
      %v1589 = vunpack.c.l.b16 %v1551
      %v1590 = vunpack.c.l.b16 %v1552
      %v1591 = vunpack.c.l.b16 %v1553
      %v1592 = vunpack.c.l.b16 %v1554
      %v1593 = vpack.c.b16 %v1588, %v1587
      %v1594 = vpack.c.b16 %v1590, %v1589
      %v1595 = vpack.c.b16 %v1592, %v1591
      %v1600 = vsel %vm199, %v1566, 0
      %v1603 = vsel %vm199, %v1568, 0
      %v1606 = vsel %vm199, %v1570, 0
      %v1609 = vsel %vm199, %v1572, 0
      %v1612 = vsel %vm199, %v1574, 0
      %v1615 = vsel %vm199, %v1576, 0
      %v1618 = vsel %vm199, %v1578, 0
      %v1621 = vsel %vm199, %v1580, 0
      %1623 = vmatprep.subr.bf16.mxu0 0
      %1624 = vmatpush1.bf16.msra.mxu0 %v1593
      %1625 = vmatprep.subr.bf16.mxu0 0
      %1626 = vmatpush1.bf16.msra.mxu0 %v1594
      %1627 = vmatprep.subr.bf16.mxu0 0
      %1628 = vmatpush1.bf16.msra.mxu0 %v1595
      %1629 = vmatprep.subr.bf16.mxu0 0
      %1630 = vmatpush1.bf16.msra.mxu0 0
      %1631 = vmatprep.subr.bf16.mxu0 0
      %1632 = vmatpush1.bf16.msra.mxu0 0
      %1633 = vmatprep.subr.bf16.mxu0 0
      %1634 = vmatpush1.bf16.msra.mxu0 0
      %1635 = vmatprep.subr.bf16.mxu0 0
      %1636 = vmatpush1.bf16.msra.mxu0 0
      %1637 = vmatprep.subr.bf16.mxu0 0
      %1638 = vmatpush1.bf16.msra.mxu0 0
      %1639 = vmatprep.subr.bf16.mxu0 0
      %1640 = vmatpush1.bf16.msra.mxu0 0
      %1641 = vmatprep.subr.bf16.mxu0 0
      %1642 = vmatpush1.bf16.msra.mxu0 0
      %1643 = vmatprep.subr.bf16.mxu0 0
      %1644 = vmatpush1.bf16.msra.mxu0 0
      %1645 = vmatprep.subr.bf16.mxu0 0
      %1646 = vmatpush1.bf16.msra.mxu0 0
      %1647 = vmatprep.subr.bf16.mxu0 0
      %1648 = vmatpush1.bf16.msra.mxu0 0
      %1649 = vmatprep.subr.bf16.mxu0 0
      %1650 = vmatpush1.bf16.msra.mxu0 0
      %1651 = vmatprep.subr.bf16.mxu0 0
      %1652 = vmatpush1.bf16.msra.mxu0 0
      %1653 = vmatprep.subr.bf16.mxu0 0
      %1654 = vmatpush1.bf16.msra.mxu0 0
      %1655 = vmatprep.mubr.bf16.mxu0 0
      %1656 = vmatmul.mubr.bf16.gmra.mrb[0].mxu0 %v1600
      %v1657 = vpop.f32.mrb[0].mxu0
      %v1658 = vadd.f32 0.0, %v1657
      %v1659 = vpop.f32.mrb[0].mxu0
      %v1660 = vpop.f32.mrb[0].mxu0
      %v1661 = vadd.f32 0.0, %v1660
      %v1662 = vpop.f32.mrb[0].mxu0
      %1663 = vmatprep.mubr.bf16.mxu0 0
      %1664 = vmatmul.mubr.bf16.gmra.mrb[0].mxu0 %v1603
      %v1665 = vpop.f32.mrb[0].mxu0
      %v1666 = vadd.f32 0.0, %v1665
      %v1667 = vpop.f32.mrb[0].mxu0
      %v1668 = vpop.f32.mrb[0].mxu0
      %v1669 = vadd.f32 0.0, %v1668
      %v1670 = vpop.f32.mrb[0].mxu0
      %1671 = vmatprep.mubr.bf16.mxu0 0
      %1672 = vmatmul.mubr.bf16.gmra.mrb[0].mxu0 %v1606
      %v1673 = vpop.f32.mrb[0].mxu0
      %v1674 = vadd.f32 0.0, %v1673
      %v1675 = vpop.f32.mrb[0].mxu0
      %v1676 = vpop.f32.mrb[0].mxu0
      %v1677 = vadd.f32 0.0, %v1676
      %v1678 = vpop.f32.mrb[0].mxu0
      %1679 = vmatprep.mubr.bf16.mxu0 0
      %1680 = vmatmul.mubr.bf16.gmra.mrb[0].mxu0 %v1609
      %v1681 = vpop.f32.mrb[0].mxu0
      %v1682 = vadd.f32 0.0, %v1681
      %v1683 = vpop.f32.mrb[0].mxu0
      %v1684 = vpop.f32.mrb[0].mxu0
      %v1685 = vadd.f32 0.0, %v1684
      %v1686 = vpop.f32.mrb[0].mxu0
      %1687 = vmatprep.mubr.bf16.mxu0 0
      %1688 = vmatmul.mubr.bf16.gmra.mrb[0].mxu0 %v1612
      %v1689 = vpop.f32.mrb[0].mxu0
      %v1690 = vadd.f32 0.0, %v1689
      %v1691 = vpop.f32.mrb[0].mxu0
      %v1692 = vpop.f32.mrb[0].mxu0
      %v1693 = vadd.f32 0.0, %v1692
      %v1694 = vpop.f32.mrb[0].mxu0
      %1695 = vmatprep.mubr.bf16.mxu0 0
      %1696 = vmatmul.mubr.bf16.gmra.mrb[0].mxu0 %v1615
      %v1697 = vpop.f32.mrb[0].mxu0
      %v1698 = vadd.f32 0.0, %v1697
      %v1699 = vpop.f32.mrb[0].mxu0
      %v1700 = vpop.f32.mrb[0].mxu0
      %v1701 = vadd.f32 0.0, %v1700
      %v1702 = vpop.f32.mrb[0].mxu0
      %1703 = vmatprep.mubr.bf16.mxu0 0
      %1704 = vmatmul.mubr.bf16.gmra.mrb[0].mxu0 %v1618
      %v1705 = vpop.f32.mrb[0].mxu0
      %v1706 = vadd.f32 0.0, %v1705
      %v1707 = vpop.f32.mrb[0].mxu0
      %v1708 = vpop.f32.mrb[0].mxu0
      %v1709 = vadd.f32 0.0, %v1708
      %v1710 = vpop.f32.mrb[0].mxu0
      %1711 = vmatprep.mubr.bf16.mxu0 0
      %1712 = vmatmul.mubr.bf16.gmra.mrb[0].mxu0 %v1621
      %v1713 = vpop.f32.mrb[0].mxu0
      %v1714 = vadd.f32 0.0, %v1713
      %v1715 = vpop.f32.mrb[0].mxu0
      %v1716 = vpop.f32.mrb[0].mxu0
      %v1717 = vadd.f32 0.0, %v1716
      %v1718 = vpop.f32.mrb[0].mxu0
      %1719 = vdwg.mxu0
      %v1720 = vadd.f32 %v846, %v1658
      %v1721 = vadd.f32 %v846, %v1661
      %v1722 = vadd.f32 %v846, %v1666
      %v1723 = vadd.f32 %v846, %v1669
      %v1724 = vadd.f32 %v846, %v1674
      %v1725 = vadd.f32 %v846, %v1677
      %v1726 = vadd.f32 %v846, %v1682
      %v1727 = vadd.f32 %v846, %v1685
      %v1728 = vadd.f32 %v846, %v1690
      %v1729 = vadd.f32 %v846, %v1693
      %v1730 = vadd.f32 %v846, %v1698
      %v1731 = vadd.f32 %v846, %v1701
      %v1732 = vadd.f32 %v846, %v1706
      %v1733 = vadd.f32 %v846, %v1709
      %v1734 = vadd.f32 %v846, %v1714
      %v1735 = vadd.f32 %v846, %v1717
      %v1736 = vld [vmem:[#allocation2 + $0x50] sm:$0xff]
      %v1737 = vld [vmem:[#allocation2 + $0x58] sm:$0xff]
      %v1738 = vld [vmem:[#allocation2 + $0x60] sm:$0xff]
      %v1739 = vld [vmem:[#allocation2 + $0x68] sm:$0xff]
      %v1740 = vld [vmem:[#allocation2 + $0x70] sm:$0xff]
      %v1741 = vld [vmem:[#allocation2 + $0x78] sm:$0xff]
      %v1742 = vld [vmem:[#allocation2 + $0x80] sm:$0xff]
      %v1743 = vld [vmem:[#allocation2 + $0x88] sm:$0xff]
      %v1744 = vld [vmem:[%s1053] sm:$0xf]
      %v1745 = vld [vmem:[%s1053 + $0x4] sm:$0xf]
      %v1746 = vld [vmem:[%s1053 + $0x8] sm:$0xf]
      %v1747 = vld [vmem:[%s1053 + $0xc] sm:$0xf]
      %v1748 = vld [vmem:[%s1053 + $0x10] sm:$0xf]
      %v1749 = vld [vmem:[%s1053 + $0x14] sm:$0xf]
      %v1756 = vunpack.c.l.b16 %v1744
      %v1757 = vunpack.c.l.b16 %v1745
      %v1758 = vunpack.c.l.b16 %v1746
      %v1759 = vunpack.c.l.b16 %v1747
      %v1760 = vunpack.c.l.b16 %v1748
      %v1761 = vunpack.c.l.b16 %v1749
      %v1762 = vpack.c.b16 %v1757, %v1756
      %v1763 = vpack.c.b16 %v1759, %v1758
      %v1764 = vpack.c.b16 %v1761, %v1760
      %v1769 = vsel %vm199, %v1736, 0
      %v1772 = vsel %vm199, %v1737, 0
      %v1775 = vsel %vm199, %v1738, 0
      %v1778 = vsel %vm199, %v1739, 0
      %v1781 = vsel %vm199, %v1740, 0
      %v1784 = vsel %vm199, %v1741, 0
      %v1787 = vsel %vm199, %v1742, 0
      %v1790 = vsel %vm199, %v1743, 0
      %1792 = vmatprep.subr.bf16.mxu0 0
      %1793 = vmatpush1.bf16.msra.mxu0 %v1762
      %1794 = vmatprep.subr.bf16.mxu0 0
      %1795 = vmatpush1.bf16.msra.mxu0 %v1763
      %1796 = vmatprep.subr.bf16.mxu0 0
      %1797 = vmatpush1.bf16.msra.mxu0 %v1764
      %1798 = vmatprep.subr.bf16.mxu0 0
      %1799 = vmatpush1.bf16.msra.mxu0 0
      %1800 = vmatprep.subr.bf16.mxu0 0
      %1801 = vmatpush1.bf16.msra.mxu0 0
      %1802 = vmatprep.subr.bf16.mxu0 0
      %1803 = vmatpush1.bf16.msra.mxu0 0
      %1804 = vmatprep.subr.bf16.mxu0 0
      %1805 = vmatpush1.bf16.msra.mxu0 0
      %1806 = vmatprep.subr.bf16.mxu0 0
      %1807 = vmatpush1.bf16.msra.mxu0 0
      %1808 = vmatprep.subr.bf16.mxu0 0
      %1809 = vmatpush1.bf16.msra.mxu0 0
      %1810 = vmatprep.subr.bf16.mxu0 0
      %1811 = vmatpush1.bf16.msra.mxu0 0
      %1812 = vmatprep.subr.bf16.mxu0 0
      %1813 = vmatpush1.bf16.msra.mxu0 0
      %1814 = vmatprep.subr.bf16.mxu0 0
      %1815 = vmatpush1.bf16.msra.mxu0 0
      %1816 = vmatprep.subr.bf16.mxu0 0
      %1817 = vmatpush1.bf16.msra.mxu0 0
      %1818 = vmatprep.subr.bf16.mxu0 0
      %1819 = vmatpush1.bf16.msra.mxu0 0
      %1820 = vmatprep.subr.bf16.mxu0 0
      %1821 = vmatpush1.bf16.msra.mxu0 0
      %1822 = vmatprep.subr.bf16.mxu0 0
      %1823 = vmatpush1.bf16.msra.mxu0 0
      %1824 = vmatprep.mubr.bf16.mxu0 0
      %1825 = vmatmul.mubr.bf16.gmra.mrb[0].mxu0 %v1769
      %v1826 = vpop.f32.mrb[0].mxu0
      %v1827 = vadd.f32 0.0, %v1826
      %v1828 = vpop.f32.mrb[0].mxu0
      %v1829 = vpop.f32.mrb[0].mxu0
      %v1830 = vadd.f32 0.0, %v1829
      %v1831 = vpop.f32.mrb[0].mxu0
      %1832 = vmatprep.mubr.bf16.mxu0 0
      %1833 = vmatmul.mubr.bf16.gmra.mrb[0].mxu0 %v1772
      %v1834 = vpop.f32.mrb[0].mxu0
      %v1835 = vadd.f32 0.0, %v1834
      %v1836 = vpop.f32.mrb[0].mxu0
      %v1837 = vpop.f32.mrb[0].mxu0
      %v1838 = vadd.f32 0.0, %v1837
      %v1839 = vpop.f32.mrb[0].mxu0
      %1840 = vmatprep.mubr.bf16.mxu0 0
      %1841 = vmatmul.mubr.bf16.gmra.mrb[0].mxu0 %v1775
      %v1842 = vpop.f32.mrb[0].mxu0
      %v1843 = vadd.f32 0.0, %v1842
      %v1844 = vpop.f32.mrb[0].mxu0
      %v1845 = vpop.f32.mrb[0].mxu0
      %v1846 = vadd.f32 0.0, %v1845
      %v1847 = vpop.f32.mrb[0].mxu0
      %1848 = vmatprep.mubr.bf16.mxu0 0
      %1849 = vmatmul.mubr.bf16.gmra.mrb[0].mxu0 %v1778
      %v1850 = vpop.f32.mrb[0].mxu0
      %v1851 = vadd.f32 0.0, %v1850
      %v1852 = vpop.f32.mrb[0].mxu0
      %v1853 = vpop.f32.mrb[0].mxu0
      %v1854 = vadd.f32 0.0, %v1853
      %v1855 = vpop.f32.mrb[0].mxu0
      %1856 = vmatprep.mubr.bf16.mxu0 0
      %1857 = vmatmul.mubr.bf16.gmra.mrb[0].mxu0 %v1781
      %v1858 = vpop.f32.mrb[0].mxu0
      %v1859 = vadd.f32 0.0, %v1858
      %v1860 = vpop.f32.mrb[0].mxu0
      %v1861 = vpop.f32.mrb[0].mxu0
      %v1862 = vadd.f32 0.0, %v1861
      %v1863 = vpop.f32.mrb[0].mxu0
      %1864 = vmatprep.mubr.bf16.mxu0 0
      %1865 = vmatmul.mubr.bf16.gmra.mrb[0].mxu0 %v1784
      %v1866 = vpop.f32.mrb[0].mxu0
      %v1867 = vadd.f32 0.0, %v1866
      %v1868 = vpop.f32.mrb[0].mxu0
      %v1869 = vpop.f32.mrb[0].mxu0
      %v1870 = vadd.f32 0.0, %v1869
      %v1871 = vpop.f32.mrb[0].mxu0
      %1872 = vmatprep.mubr.bf16.mxu0 0
      %1873 = vmatmul.mubr.bf16.gmra.mrb[0].mxu0 %v1787
      %v1874 = vpop.f32.mrb[0].mxu0
      %v1875 = vadd.f32 0.0, %v1874
      %v1876 = vpop.f32.mrb[0].mxu0
      %v1877 = vpop.f32.mrb[0].mxu0
      %v1878 = vadd.f32 0.0, %v1877
      %v1879 = vpop.f32.mrb[0].mxu0
      %1880 = vmatprep.mubr.bf16.mxu0 0
      %1881 = vmatmul.mubr.bf16.gmra.mrb[0].mxu0 %v1790
      %v1882 = vpop.f32.mrb[0].mxu0
      %v1883 = vadd.f32 0.0, %v1882
      %v1884 = vpop.f32.mrb[0].mxu0
      %v1885 = vpop.f32.mrb[0].mxu0
      %v1886 = vadd.f32 0.0, %v1885
      %v1887 = vpop.f32.mrb[0].mxu0
      %1888 = vdwg.mxu0
      %v1889 = vadd.f32 %v1720, %v1827
      %v1890 = vadd.f32 %v1721, %v1830
      %v1891 = vadd.f32 %v1722, %v1835
      %v1892 = vadd.f32 %v1723, %v1838
      %v1893 = vadd.f32 %v1724, %v1843
      %v1894 = vadd.f32 %v1725, %v1846
      %v1895 = vadd.f32 %v1726, %v1851
      %v1896 = vadd.f32 %v1727, %v1854
      %v1897 = vadd.f32 %v1728, %v1859
      %v1898 = vadd.f32 %v1729, %v1862
      %v1899 = vadd.f32 %v1730, %v1867
      %v1900 = vadd.f32 %v1731, %v1870
      %v1901 = vadd.f32 %v1732, %v1875
      %v1902 = vadd.f32 %v1733, %v1878
      %v1903 = vadd.f32 %v1734, %v1883
      %v1904 = vadd.f32 %v1735, %v1886
      %v1905 = vld [vmem:[#allocation2 + $0x58] sm:$0xf0]
      %v1906 = vld [vmem:[#allocation2 + $0x60] sm:$0xff]
      %v1907 = vld [vmem:[#allocation2 + $0x68] sm:$0xff]
      %v1908 = vld [vmem:[#allocation2 + $0x70] sm:$0xff]
      %v1909 = vld [vmem:[#allocation2 + $0x78] sm:$0xff]
      %v1910 = vld [vmem:[#allocation2 + $0x80] sm:$0xff]
      %v1911 = vld [vmem:[#allocation2 + $0x88] sm:$0xff]
      %v1912 = vld [vmem:[#allocation2 + $0x90] sm:$0xff]
      %v1913 = vld [vmem:[#allocation2 + $0x98] sm:$0xf]
      %v1914 = vld [vmem:[%s1224] sm:$0xf]
      %v1915 = vld [vmem:[%s1224 + $0x4] sm:$0xf]
      %v1916 = vld [vmem:[%s1224 + $0x8] sm:$0xf]
      %v1917 = vld [vmem:[%s1224 + $0xc] sm:$0xf]
      %v1918 = vld [vmem:[%s1224 + $0x10] sm:$0xf]
      %v1919 = vld [vmem:[%s1224 + $0x14] sm:$0xf]
      %v1929 = vrot.slane %v1905, 4
      %v1930 = vrot.slane %v1906, 4
      %v1931 = vsel %vm872, %v1929, %v1930
      %v1932 = vrot.slane %v1907, 4
      %v1933 = vsel %vm872, %v1930, %v1932
      %v1934 = vrot.slane %v1908, 4
      %v1935 = vsel %vm872, %v1932, %v1934
      %v1936 = vrot.slane %v1909, 4
      %v1937 = vsel %vm872, %v1934, %v1936
      %v1938 = vrot.slane %v1910, 4
      %v1939 = vsel %vm872, %v1936, %v1938
      %v1940 = vrot.slane %v1911, 4
      %v1941 = vsel %vm872, %v1938, %v1940
      %v1942 = vrot.slane %v1912, 4
      %v1943 = vsel %vm872, %v1940, %v1942
      %v1944 = vrot.slane %v1913, 4
      %v1945 = vsel %vm872, %v1942, %v1944
      %v1952 = vunpack.c.l.b16 %v1914
      %v1953 = vunpack.c.l.b16 %v1915
      %v1954 = vunpack.c.l.b16 %v1916
      %v1955 = vunpack.c.l.b16 %v1917
      %v1956 = vunpack.c.l.b16 %v1918
      %v1957 = vunpack.c.l.b16 %v1919
      %v1958 = vpack.c.b16 %v1953, %v1952
      %v1959 = vpack.c.b16 %v1955, %v1954
      %v1960 = vpack.c.b16 %v1957, %v1956
      %v1965 = vsel %vm199, %v1931, 0
      %v1968 = vsel %vm199, %v1933, 0
      %v1971 = vsel %vm199, %v1935, 0
      %v1974 = vsel %vm199, %v1937, 0
      %v1977 = vsel %vm199, %v1939, 0
      %v1980 = vsel %vm199, %v1941, 0
      %v1983 = vsel %vm199, %v1943, 0
      %v1986 = vsel %vm199, %v1945, 0
      %1988 = vmatprep.subr.bf16.mxu0 0
      %1989 = vmatpush1.bf16.msra.mxu0 %v1958
      %1990 = vmatprep.subr.bf16.mxu0 0
      %1991 = vmatpush1.bf16.msra.mxu0 %v1959
      %1992 = vmatprep.subr.bf16.mxu0 0
      %1993 = vmatpush1.bf16.msra.mxu0 %v1960
      %1994 = vmatprep.subr.bf16.mxu0 0
      %1995 = vmatpush1.bf16.msra.mxu0 0
      %1996 = vmatprep.subr.bf16.mxu0 0
      %1997 = vmatpush1.bf16.msra.mxu0 0
      %1998 = vmatprep.subr.bf16.mxu0 0
      %1999 = vmatpush1.bf16.msra.mxu0 0
      %2000 = vmatprep.subr.bf16.mxu0 0
      %2001 = vmatpush1.bf16.msra.mxu0 0
      %2002 = vmatprep.subr.bf16.mxu0 0
      %2003 = vmatpush1.bf16.msra.mxu0 0
      %2004 = vmatprep.subr.bf16.mxu0 0
      %2005 = vmatpush1.bf16.msra.mxu0 0
      %2006 = vmatprep.subr.bf16.mxu0 0
      %2007 = vmatpush1.bf16.msra.mxu0 0
      %2008 = vmatprep.subr.bf16.mxu0 0
      %2009 = vmatpush1.bf16.msra.mxu0 0
      %2010 = vmatprep.subr.bf16.mxu0 0
      %2011 = vmatpush1.bf16.msra.mxu0 0
      %2012 = vmatprep.subr.bf16.mxu0 0
      %2013 = vmatpush1.bf16.msra.mxu0 0
      %2014 = vmatprep.subr.bf16.mxu0 0
      %2015 = vmatpush1.bf16.msra.mxu0 0
      %2016 = vmatprep.subr.bf16.mxu0 0
      %2017 = vmatpush1.bf16.msra.mxu0 0
      %2018 = vmatprep.subr.bf16.mxu0 0
      %2019 = vmatpush1.bf16.msra.mxu0 0
      %2020 = vmatprep.mubr.bf16.mxu0 0
      %2021 = vmatmul.mubr.bf16.gmra.mrb[0].mxu0 %v1965
      %v2022 = vpop.f32.mrb[0].mxu0
      %v2023 = vadd.f32 0.0, %v2022
      %v2024 = vpop.f32.mrb[0].mxu0
      %v2025 = vpop.f32.mrb[0].mxu0
      %v2026 = vadd.f32 0.0, %v2025
      %v2027 = vpop.f32.mrb[0].mxu0
      %2028 = vmatprep.mubr.bf16.mxu0 0
      %2029 = vmatmul.mubr.bf16.gmra.mrb[0].mxu0 %v1968
      %v2030 = vpop.f32.mrb[0].mxu0
      %v2031 = vadd.f32 0.0, %v2030
      %v2032 = vpop.f32.mrb[0].mxu0
      %v2033 = vpop.f32.mrb[0].mxu0
      %v2034 = vadd.f32 0.0, %v2033
      %v2035 = vpop.f32.mrb[0].mxu0
      %2036 = vmatprep.mubr.bf16.mxu0 0
      %2037 = vmatmul.mubr.bf16.gmra.mrb[0].mxu0 %v1971
      %v2038 = vpop.f32.mrb[0].mxu0
      %v2039 = vadd.f32 0.0, %v2038
      %v2040 = vpop.f32.mrb[0].mxu0
      %v2041 = vpop.f32.mrb[0].mxu0
      %v2042 = vadd.f32 0.0, %v2041
      %v2043 = vpop.f32.mrb[0].mxu0
      %2044 = vmatprep.mubr.bf16.mxu0 0
      %2045 = vmatmul.mubr.bf16.gmra.mrb[0].mxu0 %v1974
      %v2046 = vpop.f32.mrb[0].mxu0
      %v2047 = vadd.f32 0.0, %v2046
      %v2048 = vpop.f32.mrb[0].mxu0
      %v2049 = vpop.f32.mrb[0].mxu0
      %v2050 = vadd.f32 0.0, %v2049
      %v2051 = vpop.f32.mrb[0].mxu0
      %2052 = vmatprep.mubr.bf16.mxu0 0
      %2053 = vmatmul.mubr.bf16.gmra.mrb[0].mxu0 %v1977
      %v2054 = vpop.f32.mrb[0].mxu0
      %v2055 = vadd.f32 0.0, %v2054
      %v2056 = vpop.f32.mrb[0].mxu0
      %v2057 = vpop.f32.mrb[0].mxu0
      %v2058 = vadd.f32 0.0, %v2057
      %v2059 = vpop.f32.mrb[0].mxu0
      %2060 = vmatprep.mubr.bf16.mxu0 0
      %2061 = vmatmul.mubr.bf16.gmra.mrb[0].mxu0 %v1980
      %v2062 = vpop.f32.mrb[0].mxu0
      %v2063 = vadd.f32 0.0, %v2062
      %v2064 = vpop.f32.mrb[0].mxu0
      %v2065 = vpop.f32.mrb[0].mxu0
      %v2066 = vadd.f32 0.0, %v2065
      %v2067 = vpop.f32.mrb[0].mxu0
      %2068 = vmatprep.mubr.bf16.mxu0 0
      %2069 = vmatmul.mubr.bf16.gmra.mrb[0].mxu0 %v1983
      %v2070 = vpop.f32.mrb[0].mxu0
      %v2071 = vadd.f32 0.0, %v2070
      %v2072 = vpop.f32.mrb[0].mxu0
      %v2073 = vpop.f32.mrb[0].mxu0
      %v2074 = vadd.f32 0.0, %v2073
      %v2075 = vpop.f32.mrb[0].mxu0
      %2076 = vmatprep.mubr.bf16.mxu0 0
      %2077 = vmatmul.mubr.bf16.gmra.mrb[0].mxu0 %v1986
      %v2078 = vpop.f32.mrb[0].mxu0
      %v2079 = vadd.f32 0.0, %v2078
      %v2080 = vpop.f32.mrb[0].mxu0
      %v2081 = vpop.f32.mrb[0].mxu0
      %v2082 = vadd.f32 0.0, %v2081
      %v2083 = vpop.f32.mrb[0].mxu0
      %2084 = vdwg.mxu0
      %v2085 = vadd.f32 %v1889, %v2023
      %v2086 = vadd.f32 %v1890, %v2026
      %v2087 = vadd.f32 %v1891, %v2031
      %v2088 = vadd.f32 %v1892, %v2034
      %v2089 = vadd.f32 %v1893, %v2039
      %v2090 = vadd.f32 %v1894, %v2042
      %v2091 = vadd.f32 %v1895, %v2047
      %v2092 = vadd.f32 %v1896, %v2050
      %v2093 = vadd.f32 %v1897, %v2055
      %v2094 = vadd.f32 %v1898, %v2058
      %v2095 = vadd.f32 %v1899, %v2063
      %v2096 = vadd.f32 %v1900, %v2066
      %v2097 = vadd.f32 %v1901, %v2071
      %v2098 = vadd.f32 %v1902, %v2074
      %v2099 = vadd.f32 %v1903, %v2079
      %v2100 = vadd.f32 %v1904, %v2082
      %v2101 = vld [vmem:[%s1 + $0x80] sm:$0xff]
      %v2102 = vld [vmem:[%s1 + $0x88] sm:$0xff]
      %v2103 = vld [vmem:[%s1 + $0x90] sm:$0xff]
      %v2104 = vld [vmem:[%s1 + $0x98] sm:$0xff]
      %v2105 = vld [vmem:[%s1 + $0xa0] sm:$0xff]
      %v2106 = vld [vmem:[%s1 + $0xa8] sm:$0xff]
      %v2107 = vld [vmem:[%s1 + $0xb0] sm:$0xff]
      %v2108 = vld [vmem:[%s1 + $0xb8] sm:$0xff]
      %v2109 = vld [vmem:[%s1 + $0xc0] sm:$0xff]
      %v2110 = vld [vmem:[%s1 + $0xc8] sm:$0xff]
      %v2111 = vld [vmem:[%s1 + $0xd0] sm:$0xff]
      %v2112 = vld [vmem:[%s1 + $0xd8] sm:$0xff]
      %v2113 = vld [vmem:[%s1 + $0xe0] sm:$0xff]
      %v2114 = vld [vmem:[%s1 + $0xe8] sm:$0xff]
      %v2115 = vld [vmem:[%s1 + $0xf0] sm:$0xff]
      %v2116 = vld [vmem:[%s1 + $0xf8] sm:$0xff]
      %2118 = vset.pattern.permute.xlu0 0
      %2119 = vperm.xlu0 %2118, %v2101
      %v2120 = vpop.permute.xlu0 %2119
      %2123 = vset.pattern.permute.xlu0 0
      %2124 = vperm.xlu0 %2123, %v2102
      %v2125 = vpop.permute.xlu0 %2124
      %2128 = vset.pattern.permute.xlu0 0
      %2129 = vperm.xlu0 %2128, %v2103
      %v2130 = vpop.permute.xlu0 %2129
      %2133 = vset.pattern.permute.xlu0 0
      %2134 = vperm.xlu0 %2133, %v2104
      %v2135 = vpop.permute.xlu0 %2134
      %2138 = vset.pattern.permute.xlu0 0
      %2139 = vperm.xlu0 %2138, %v2105
      %v2140 = vpop.permute.xlu0 %2139
      %2143 = vset.pattern.permute.xlu0 0
      %2144 = vperm.xlu0 %2143, %v2106
      %v2145 = vpop.permute.xlu0 %2144
      %2148 = vset.pattern.permute.xlu0 0
      %2149 = vperm.xlu0 %2148, %v2107
      %v2150 = vpop.permute.xlu0 %2149
      %2153 = vset.pattern.permute.xlu0 0
      %2154 = vperm.xlu0 %2153, %v2108
      %v2155 = vpop.permute.xlu0 %2154
      %2158 = vset.pattern.permute.xlu0 0
      %2159 = vperm.xlu0 %2158, %v2109
      %v2160 = vpop.permute.xlu0 %2159
      %2163 = vset.pattern.permute.xlu0 0
      %2164 = vperm.xlu0 %2163, %v2110
      %v2165 = vpop.permute.xlu0 %2164
      %2168 = vset.pattern.permute.xlu0 0
      %2169 = vperm.xlu0 %2168, %v2111
      %v2170 = vpop.permute.xlu0 %2169
      %2173 = vset.pattern.permute.xlu0 0
      %2174 = vperm.xlu0 %2173, %v2112
      %v2175 = vpop.permute.xlu0 %2174
      %2178 = vset.pattern.permute.xlu0 0
      %2179 = vperm.xlu0 %2178, %v2113
      %v2180 = vpop.permute.xlu0 %2179
      %2183 = vset.pattern.permute.xlu0 0
      %2184 = vperm.xlu0 %2183, %v2114
      %v2185 = vpop.permute.xlu0 %2184
      %2188 = vset.pattern.permute.xlu0 0
      %2189 = vperm.xlu0 %2188, %v2115
      %v2190 = vpop.permute.xlu0 %2189
      %2193 = vset.pattern.permute.xlu0 0
      %2194 = vperm.xlu0 %2193, %v2116
      %v2195 = vpop.permute.xlu0 %2194
      %v2197 = vmul.f32 %v2085, %v2120
      %v2198 = vmul.f32 %v2086, %v2125
      %v2199 = vmul.f32 %v2087, %v2130
      %v2200 = vmul.f32 %v2088, %v2135
      %v2201 = vmul.f32 %v2089, %v2140
      %v2202 = vmul.f32 %v2090, %v2145
      %v2203 = vmul.f32 %v2091, %v2150
      %v2204 = vmul.f32 %v2092, %v2155
      %v2205 = vmul.f32 %v2093, %v2160
      %v2206 = vmul.f32 %v2094, %v2165
      %v2207 = vmul.f32 %v2095, %v2170
      %v2208 = vmul.f32 %v2096, %v2175
      %v2209 = vmul.f32 %v2097, %v2180
      %v2210 = vmul.f32 %v2098, %v2185
      %v2211 = vmul.f32 %v2099, %v2190
      %v2212 = vmul.f32 %v2100, %v2195
      %2213 = vst.msk [vmem:[%s197 + $0x80] sm:$0xff] %vm510, %v2197
      %2214 = vst.msk [vmem:[%s197 + $0x88] sm:$0xff] %vm510, %v2198
      %2215 = vst.msk [vmem:[%s197 + $0x90] sm:$0xff] %vm510, %v2199
      %2216 = vst.msk [vmem:[%s197 + $0x98] sm:$0xff] %vm510, %v2200
      %2217 = vst.msk [vmem:[%s197 + $0xa0] sm:$0xff] %vm510, %v2201
      %2218 = vst.msk [vmem:[%s197 + $0xa8] sm:$0xff] %vm510, %v2202
      %2219 = vst.msk [vmem:[%s197 + $0xb0] sm:$0xff] %vm510, %v2203
      %2220 = vst.msk [vmem:[%s197 + $0xb8] sm:$0xff] %vm510, %v2204
      %2221 = vst.msk [vmem:[%s197 + $0xc0] sm:$0xff] %vm510, %v2205
      %2222 = vst.msk [vmem:[%s197 + $0xc8] sm:$0xff] %vm510, %v2206
      %2223 = vst.msk [vmem:[%s197 + $0xd0] sm:$0xff] %vm510, %v2207
      %2224 = vst.msk [vmem:[%s197 + $0xd8] sm:$0xff] %vm510, %v2208
      %2225 = vst.msk [vmem:[%s197 + $0xe0] sm:$0xff] %vm510, %v2209
      %2226 = vst.msk [vmem:[%s197 + $0xe8] sm:$0xff] %vm510, %v2210
      %2227 = vst.msk [vmem:[%s197 + $0xf0] sm:$0xff] %vm510, %v2211
      %2228 = vst.msk [vmem:[%s197 + $0xf8] sm:$0xff] %vm510, %v2212
      %v2229 = vld [vmem:[#allocation2 + $0x80] sm:$0xf0]
      %v2230 = vld [vmem:[#allocation2 + $0x88] sm:$0xff]
      %v2231 = vld [vmem:[#allocation2 + $0x90] sm:$0xff]
      %v2232 = vld [vmem:[#allocation2 + $0x98] sm:$0xff]
      %v2233 = vld [vmem:[#allocation2 + $0xa0] sm:$0xff]
      %v2234 = vld [vmem:[#allocation2 + $0xa8] sm:$0xff]
      %v2235 = vld [vmem:[#allocation2 + $0xb0] sm:$0xff]
      %v2236 = vld [vmem:[#allocation2 + $0xb8] sm:$0xff]
      %v2237 = vld [vmem:[#allocation2 + $0xc0] sm:$0xf]
      %v2238 = vld [vmem:[%s2] sm:$0xf]
      %v2239 = vld [vmem:[%s2 + $0x4] sm:$0xf]
      %v2240 = vld [vmem:[%s2 + $0x8] sm:$0xf]
      %v2241 = vld [vmem:[%s2 + $0xc] sm:$0xf]
      %v2242 = vld [vmem:[%s2 + $0x10] sm:$0xf]
      %v2243 = vld [vmem:[%s2 + $0x14] sm:$0xf]
      %v2253 = vrot.slane %v2229, 4
      %v2254 = vrot.slane %v2230, 4
      %v2255 = vsel %vm872, %v2253, %v2254
      %v2256 = vrot.slane %v2231, 4
      %v2257 = vsel %vm872, %v2254, %v2256
      %v2258 = vrot.slane %v2232, 4
      %v2259 = vsel %vm872, %v2256, %v2258
      %v2260 = vrot.slane %v2233, 4
      %v2261 = vsel %vm872, %v2258, %v2260
      %v2262 = vrot.slane %v2234, 4
      %v2263 = vsel %vm872, %v2260, %v2262
      %v2264 = vrot.slane %v2235, 4
      %v2265 = vsel %vm872, %v2262, %v2264
      %v2266 = vrot.slane %v2236, 4
      %v2267 = vsel %vm872, %v2264, %v2266
      %v2268 = vrot.slane %v2237, 4
      %v2269 = vsel %vm872, %v2266, %v2268
      %v2276 = vunpack.c.l.b16 %v2238
      %v2277 = vunpack.c.l.b16 %v2239
      %v2278 = vunpack.c.l.b16 %v2240
      %v2279 = vunpack.c.l.b16 %v2241
      %v2280 = vunpack.c.l.b16 %v2242
      %v2281 = vunpack.c.l.b16 %v2243
      %v2282 = vpack.c.b16 %v2277, %v2276
      %v2283 = vpack.c.b16 %v2279, %v2278
      %v2284 = vpack.c.b16 %v2281, %v2280
      %v2289 = vsel %vm199, %v2255, 0
      %v2292 = vsel %vm199, %v2257, 0
      %v2295 = vsel %vm199, %v2259, 0
      %v2298 = vsel %vm199, %v2261, 0
      %v2301 = vsel %vm199, %v2263, 0
      %v2304 = vsel %vm199, %v2265, 0
      %v2307 = vsel %vm199, %v2267, 0
      %v2310 = vsel %vm199, %v2269, 0
      %2312 = vmatprep.subr.bf16.mxu0 0
      %2313 = vmatpush1.bf16.msra.mxu0 %v2282
      %2314 = vmatprep.subr.bf16.mxu0 0
      %2315 = vmatpush1.bf16.msra.mxu0 %v2283
      %2316 = vmatprep.subr.bf16.mxu0 0
      %2317 = vmatpush1.bf16.msra.mxu0 %v2284
      %2318 = vmatprep.subr.bf16.mxu0 0
      %2319 = vmatpush1.bf16.msra.mxu0 0
      %2320 = vmatprep.subr.bf16.mxu0 0
      %2321 = vmatpush1.bf16.msra.mxu0 0
      %2322 = vmatprep.subr.bf16.mxu0 0
      %2323 = vmatpush1.bf16.msra.mxu0 0
      %2324 = vmatprep.subr.bf16.mxu0 0
      %2325 = vmatpush1.bf16.msra.mxu0 0
      %2326 = vmatprep.subr.bf16.mxu0 0
      %2327 = vmatpush1.bf16.msra.mxu0 0
      %2328 = vmatprep.subr.bf16.mxu0 0
      %2329 = vmatpush1.bf16.msra.mxu0 0
      %2330 = vmatprep.subr.bf16.mxu0 0
      %2331 = vmatpush1.bf16.msra.mxu0 0
      %2332 = vmatprep.subr.bf16.mxu0 0
      %2333 = vmatpush1.bf16.msra.mxu0 0
      %2334 = vmatprep.subr.bf16.mxu0 0
      %2335 = vmatpush1.bf16.msra.mxu0 0
      %2336 = vmatprep.subr.bf16.mxu0 0
      %2337 = vmatpush1.bf16.msra.mxu0 0
      %2338 = vmatprep.subr.bf16.mxu0 0
      %2339 = vmatpush1.bf16.msra.mxu0 0
      %2340 = vmatprep.subr.bf16.mxu0 0
      %2341 = vmatpush1.bf16.msra.mxu0 0
      %2342 = vmatprep.subr.bf16.mxu0 0
      %2343 = vmatpush1.bf16.msra.mxu0 0
      %2344 = vmatprep.mubr.bf16.mxu0 0
      %2345 = vmatmul.mubr.bf16.gmra.mrb[0].mxu0 %v2289
      %v2346 = vpop.f32.mrb[0].mxu0
      %v2347 = vadd.f32 0.0, %v2346
      %v2348 = vpop.f32.mrb[0].mxu0
      %v2349 = vpop.f32.mrb[0].mxu0
      %v2350 = vadd.f32 0.0, %v2349
      %v2351 = vpop.f32.mrb[0].mxu0
      %2352 = vmatprep.mubr.bf16.mxu0 0
      %2353 = vmatmul.mubr.bf16.gmra.mrb[0].mxu0 %v2292
      %v2354 = vpop.f32.mrb[0].mxu0
      %v2355 = vadd.f32 0.0, %v2354
      %v2356 = vpop.f32.mrb[0].mxu0
      %v2357 = vpop.f32.mrb[0].mxu0
      %v2358 = vadd.f32 0.0, %v2357
      %v2359 = vpop.f32.mrb[0].mxu0
      %2360 = vmatprep.mubr.bf16.mxu0 0
      %2361 = vmatmul.mubr.bf16.gmra.mrb[0].mxu0 %v2295
      %v2362 = vpop.f32.mrb[0].mxu0
      %v2363 = vadd.f32 0.0, %v2362
      %v2364 = vpop.f32.mrb[0].mxu0
      %v2365 = vpop.f32.mrb[0].mxu0
      %v2366 = vadd.f32 0.0, %v2365
      %v2367 = vpop.f32.mrb[0].mxu0
      %2368 = vmatprep.mubr.bf16.mxu0 0
      %2369 = vmatmul.mubr.bf16.gmra.mrb[0].mxu0 %v2298
      %v2370 = vpop.f32.mrb[0].mxu0
      %v2371 = vadd.f32 0.0, %v2370
      %v2372 = vpop.f32.mrb[0].mxu0
      %v2373 = vpop.f32.mrb[0].mxu0
      %v2374 = vadd.f32 0.0, %v2373
      %v2375 = vpop.f32.mrb[0].mxu0
      %2376 = vmatprep.mubr.bf16.mxu0 0
      %2377 = vmatmul.mubr.bf16.gmra.mrb[0].mxu0 %v2301
      %v2378 = vpop.f32.mrb[0].mxu0
      %v2379 = vadd.f32 0.0, %v2378
      %v2380 = vpop.f32.mrb[0].mxu0
      %v2381 = vpop.f32.mrb[0].mxu0
      %v2382 = vadd.f32 0.0, %v2381
      %v2383 = vpop.f32.mrb[0].mxu0
      %2384 = vmatprep.mubr.bf16.mxu0 0
      %2385 = vmatmul.mubr.bf16.gmra.mrb[0].mxu0 %v2304
      %v2386 = vpop.f32.mrb[0].mxu0
      %v2387 = vadd.f32 0.0, %v2386
      %v2388 = vpop.f32.mrb[0].mxu0
      %v2389 = vpop.f32.mrb[0].mxu0
      %v2390 = vadd.f32 0.0, %v2389
      %v2391 = vpop.f32.mrb[0].mxu0
      %2392 = vmatprep.mubr.bf16.mxu0 0
      %2393 = vmatmul.mubr.bf16.gmra.mrb[0].mxu0 %v2307
      %v2394 = vpop.f32.mrb[0].mxu0
      %v2395 = vadd.f32 0.0, %v2394
      %v2396 = vpop.f32.mrb[0].mxu0
      %v2397 = vpop.f32.mrb[0].mxu0
      %v2398 = vadd.f32 0.0, %v2397
      %v2399 = vpop.f32.mrb[0].mxu0
      %2400 = vmatprep.mubr.bf16.mxu0 0
      %2401 = vmatmul.mubr.bf16.gmra.mrb[0].mxu0 %v2310
      %v2402 = vpop.f32.mrb[0].mxu0
      %v2403 = vadd.f32 0.0, %v2402
      %v2404 = vpop.f32.mrb[0].mxu0
      %v2405 = vpop.f32.mrb[0].mxu0
      %v2406 = vadd.f32 0.0, %v2405
      %v2407 = vpop.f32.mrb[0].mxu0
      %2408 = vdwg.mxu0
      %v2409 = vadd.f32 %v846, %v2347
      %v2410 = vadd.f32 %v846, %v2350
      %v2411 = vadd.f32 %v846, %v2355
      %v2412 = vadd.f32 %v846, %v2358
      %v2413 = vadd.f32 %v846, %v2363
      %v2414 = vadd.f32 %v846, %v2366
      %v2415 = vadd.f32 %v846, %v2371
      %v2416 = vadd.f32 %v846, %v2374
      %v2417 = vadd.f32 %v846, %v2379
      %v2418 = vadd.f32 %v846, %v2382
      %v2419 = vadd.f32 %v846, %v2387
      %v2420 = vadd.f32 %v846, %v2390
      %v2421 = vadd.f32 %v846, %v2395
      %v2422 = vadd.f32 %v846, %v2398
      %v2423 = vadd.f32 %v846, %v2403
      %v2424 = vadd.f32 %v846, %v2406
      %v2425 = vld [vmem:[#allocation2 + $0x90] sm:$0xff]
      %v2426 = vld [vmem:[#allocation2 + $0x98] sm:$0xff]
      %v2427 = vld [vmem:[#allocation2 + $0xa0] sm:$0xff]
      %v2428 = vld [vmem:[#allocation2 + $0xa8] sm:$0xff]
      %v2429 = vld [vmem:[#allocation2 + $0xb0] sm:$0xff]
      %v2430 = vld [vmem:[#allocation2 + $0xb8] sm:$0xff]
      %v2431 = vld [vmem:[#allocation2 + $0xc0] sm:$0xff]
      %v2432 = vld [vmem:[#allocation2 + $0xc8] sm:$0xff]
      %v2433 = vld [vmem:[%s1053] sm:$0xf]
      %v2434 = vld [vmem:[%s1053 + $0x4] sm:$0xf]
      %v2435 = vld [vmem:[%s1053 + $0x8] sm:$0xf]
      %v2436 = vld [vmem:[%s1053 + $0xc] sm:$0xf]
      %v2437 = vld [vmem:[%s1053 + $0x10] sm:$0xf]
      %v2438 = vld [vmem:[%s1053 + $0x14] sm:$0xf]
      %v2445 = vunpack.c.l.b16 %v2433
      %v2446 = vunpack.c.l.b16 %v2434
      %v2447 = vunpack.c.l.b16 %v2435
      %v2448 = vunpack.c.l.b16 %v2436
      %v2449 = vunpack.c.l.b16 %v2437
      %v2450 = vunpack.c.l.b16 %v2438
      %v2451 = vpack.c.b16 %v2446, %v2445
      %v2452 = vpack.c.b16 %v2448, %v2447
      %v2453 = vpack.c.b16 %v2450, %v2449
      %v2458 = vsel %vm199, %v2425, 0
      %v2461 = vsel %vm199, %v2426, 0
      %v2464 = vsel %vm199, %v2427, 0
      %v2467 = vsel %vm199, %v2428, 0
      %v2470 = vsel %vm199, %v2429, 0
      %v2473 = vsel %vm199, %v2430, 0
      %v2476 = vsel %vm199, %v2431, 0
      %v2479 = vsel %vm199, %v2432, 0
      %2481 = vmatprep.subr.bf16.mxu0 0
      %2482 = vmatpush1.bf16.msra.mxu0 %v2451
      %2483 = vmatprep.subr.bf16.mxu0 0
      %2484 = vmatpush1.bf16.msra.mxu0 %v2452
      %2485 = vmatprep.subr.bf16.mxu0 0
      %2486 = vmatpush1.bf16.msra.mxu0 %v2453
      %2487 = vmatprep.subr.bf16.mxu0 0
      %2488 = vmatpush1.bf16.msra.mxu0 0
      %2489 = vmatprep.subr.bf16.mxu0 0
      %2490 = vmatpush1.bf16.msra.mxu0 0
      %2491 = vmatprep.subr.bf16.mxu0 0
      %2492 = vmatpush1.bf16.msra.mxu0 0
      %2493 = vmatprep.subr.bf16.mxu0 0
      %2494 = vmatpush1.bf16.msra.mxu0 0
      %2495 = vmatprep.subr.bf16.mxu0 0
      %2496 = vmatpush1.bf16.msra.mxu0 0
      %2497 = vmatprep.subr.bf16.mxu0 0
      %2498 = vmatpush1.bf16.msra.mxu0 0
      %2499 = vmatprep.subr.bf16.mxu0 0
      %2500 = vmatpush1.bf16.msra.mxu0 0
      %2501 = vmatprep.subr.bf16.mxu0 0
      %2502 = vmatpush1.bf16.msra.mxu0 0
      %2503 = vmatprep.subr.bf16.mxu0 0
      %2504 = vmatpush1.bf16.msra.mxu0 0
      %2505 = vmatprep.subr.bf16.mxu0 0
      %2506 = vmatpush1.bf16.msra.mxu0 0
      %2507 = vmatprep.subr.bf16.mxu0 0
      %2508 = vmatpush1.bf16.msra.mxu0 0
      %2509 = vmatprep.subr.bf16.mxu0 0
      %2510 = vmatpush1.bf16.msra.mxu0 0
      %2511 = vmatprep.subr.bf16.mxu0 0
      %2512 = vmatpush1.bf16.msra.mxu0 0
      %2513 = vmatprep.mubr.bf16.mxu0 0
      %2514 = vmatmul.mubr.bf16.gmra.mrb[0].mxu0 %v2458
      %v2515 = vpop.f32.mrb[0].mxu0
      %v2516 = vadd.f32 0.0, %v2515
      %v2517 = vpop.f32.mrb[0].mxu0
      %v2518 = vpop.f32.mrb[0].mxu0
      %v2519 = vadd.f32 0.0, %v2518
      %v2520 = vpop.f32.mrb[0].mxu0
      %2521 = vmatprep.mubr.bf16.mxu0 0
      %2522 = vmatmul.mubr.bf16.gmra.mrb[0].mxu0 %v2461
      %v2523 = vpop.f32.mrb[0].mxu0
      %v2524 = vadd.f32 0.0, %v2523
      %v2525 = vpop.f32.mrb[0].mxu0
      %v2526 = vpop.f32.mrb[0].mxu0
      %v2527 = vadd.f32 0.0, %v2526
      %v2528 = vpop.f32.mrb[0].mxu0
      %2529 = vmatprep.mubr.bf16.mxu0 0
      %2530 = vmatmul.mubr.bf16.gmra.mrb[0].mxu0 %v2464
      %v2531 = vpop.f32.mrb[0].mxu0
      %v2532 = vadd.f32 0.0, %v2531
      %v2533 = vpop.f32.mrb[0].mxu0
      %v2534 = vpop.f32.mrb[0].mxu0
      %v2535 = vadd.f32 0.0, %v2534
      %v2536 = vpop.f32.mrb[0].mxu0
      %2537 = vmatprep.mubr.bf16.mxu0 0
      %2538 = vmatmul.mubr.bf16.gmra.mrb[0].mxu0 %v2467
      %v2539 = vpop.f32.mrb[0].mxu0
      %v2540 = vadd.f32 0.0, %v2539
      %v2541 = vpop.f32.mrb[0].mxu0
      %v2542 = vpop.f32.mrb[0].mxu0
      %v2543 = vadd.f32 0.0, %v2542
      %v2544 = vpop.f32.mrb[0].mxu0
      %2545 = vmatprep.mubr.bf16.mxu0 0
      %2546 = vmatmul.mubr.bf16.gmra.mrb[0].mxu0 %v2470
      %v2547 = vpop.f32.mrb[0].mxu0
      %v2548 = vadd.f32 0.0, %v2547
      %v2549 = vpop.f32.mrb[0].mxu0
      %v2550 = vpop.f32.mrb[0].mxu0
      %v2551 = vadd.f32 0.0, %v2550
      %v2552 = vpop.f32.mrb[0].mxu0
      %2553 = vmatprep.mubr.bf16.mxu0 0
      %2554 = vmatmul.mubr.bf16.gmra.mrb[0].mxu0 %v2473
      %v2555 = vpop.f32.mrb[0].mxu0
      %v2556 = vadd.f32 0.0, %v2555
      %v2557 = vpop.f32.mrb[0].mxu0
      %v2558 = vpop.f32.mrb[0].mxu0
      %v2559 = vadd.f32 0.0, %v2558
      %v2560 = vpop.f32.mrb[0].mxu0
      %2561 = vmatprep.mubr.bf16.mxu0 0
      %2562 = vmatmul.mubr.bf16.gmra.mrb[0].mxu0 %v2476
      %v2563 = vpop.f32.mrb[0].mxu0
      %v2564 = vadd.f32 0.0, %v2563
      %v2565 = vpop.f32.mrb[0].mxu0
      %v2566 = vpop.f32.mrb[0].mxu0
      %v2567 = vadd.f32 0.0, %v2566
      %v2568 = vpop.f32.mrb[0].mxu0
      %2569 = vmatprep.mubr.bf16.mxu0 0
      %2570 = vmatmul.mubr.bf16.gmra.mrb[0].mxu0 %v2479
      %v2571 = vpop.f32.mrb[0].mxu0
      %v2572 = vadd.f32 0.0, %v2571
      %v2573 = vpop.f32.mrb[0].mxu0
      %v2574 = vpop.f32.mrb[0].mxu0
      %v2575 = vadd.f32 0.0, %v2574
      %v2576 = vpop.f32.mrb[0].mxu0
      %2577 = vdwg.mxu0
      %v2578 = vadd.f32 %v2409, %v2516
      %v2579 = vadd.f32 %v2410, %v2519
      %v2580 = vadd.f32 %v2411, %v2524
      %v2581 = vadd.f32 %v2412, %v2527
      %v2582 = vadd.f32 %v2413, %v2532
      %v2583 = vadd.f32 %v2414, %v2535
      %v2584 = vadd.f32 %v2415, %v2540
      %v2585 = vadd.f32 %v2416, %v2543
      %v2586 = vadd.f32 %v2417, %v2548
      %v2587 = vadd.f32 %v2418, %v2551
      %v2588 = vadd.f32 %v2419, %v2556
      %v2589 = vadd.f32 %v2420, %v2559
      %v2590 = vadd.f32 %v2421, %v2564
      %v2591 = vadd.f32 %v2422, %v2567
      %v2592 = vadd.f32 %v2423, %v2572
      %v2593 = vadd.f32 %v2424, %v2575
      %v2594 = vld [vmem:[#allocation2 + $0x98] sm:$0xf0]
      %v2595 = vld [vmem:[#allocation2 + $0xa0] sm:$0xff]
      %v2596 = vld [vmem:[#allocation2 + $0xa8] sm:$0xff]
      %v2597 = vld [vmem:[#allocation2 + $0xb0] sm:$0xff]
      %v2598 = vld [vmem:[#allocation2 + $0xb8] sm:$0xff]
      %v2599 = vld [vmem:[#allocation2 + $0xc0] sm:$0xff]
      %v2600 = vld [vmem:[#allocation2 + $0xc8] sm:$0xff]
      %v2601 = vld [vmem:[#allocation2 + $0xd0] sm:$0xff]
      %v2602 = vld [vmem:[#allocation2 + $0xd8] sm:$0xf]
      %v2603 = vld [vmem:[%s1224] sm:$0xf]
      %v2604 = vld [vmem:[%s1224 + $0x4] sm:$0xf]
      %v2605 = vld [vmem:[%s1224 + $0x8] sm:$0xf]
      %v2606 = vld [vmem:[%s1224 + $0xc] sm:$0xf]
      %v2607 = vld [vmem:[%s1224 + $0x10] sm:$0xf]
      %v2608 = vld [vmem:[%s1224 + $0x14] sm:$0xf]
      %v2618 = vrot.slane %v2594, 4
      %v2619 = vrot.slane %v2595, 4
      %v2620 = vsel %vm872, %v2618, %v2619
      %v2621 = vrot.slane %v2596, 4
      %v2622 = vsel %vm872, %v2619, %v2621
      %v2623 = vrot.slane %v2597, 4
      %v2624 = vsel %vm872, %v2621, %v2623
      %v2625 = vrot.slane %v2598, 4
      %v2626 = vsel %vm872, %v2623, %v2625
      %v2627 = vrot.slane %v2599, 4
      %v2628 = vsel %vm872, %v2625, %v2627
      %v2629 = vrot.slane %v2600, 4
      %v2630 = vsel %vm872, %v2627, %v2629
      %v2631 = vrot.slane %v2601, 4
      %v2632 = vsel %vm872, %v2629, %v2631
      %v2633 = vrot.slane %v2602, 4
      %v2634 = vsel %vm872, %v2631, %v2633
      %v2641 = vunpack.c.l.b16 %v2603
      %v2642 = vunpack.c.l.b16 %v2604
      %v2643 = vunpack.c.l.b16 %v2605
      %v2644 = vunpack.c.l.b16 %v2606
      %v2645 = vunpack.c.l.b16 %v2607
      %v2646 = vunpack.c.l.b16 %v2608
      %v2647 = vpack.c.b16 %v2642, %v2641
      %v2648 = vpack.c.b16 %v2644, %v2643
      %v2649 = vpack.c.b16 %v2646, %v2645
      %v2654 = vsel %vm199, %v2620, 0
      %v2657 = vsel %vm199, %v2622, 0
      %v2660 = vsel %vm199, %v2624, 0
      %v2663 = vsel %vm199, %v2626, 0
      %v2666 = vsel %vm199, %v2628, 0
      %v2669 = vsel %vm199, %v2630, 0
      %v2672 = vsel %vm199, %v2632, 0
      %v2675 = vsel %vm199, %v2634, 0
      %2677 = vmatprep.subr.bf16.mxu0 0
      %2678 = vmatpush1.bf16.msra.mxu0 %v2647
      %2679 = vmatprep.subr.bf16.mxu0 0
      %2680 = vmatpush1.bf16.msra.mxu0 %v2648
      %2681 = vmatprep.subr.bf16.mxu0 0
      %2682 = vmatpush1.bf16.msra.mxu0 %v2649
      %2683 = vmatprep.subr.bf16.mxu0 0
      %2684 = vmatpush1.bf16.msra.mxu0 0
      %2685 = vmatprep.subr.bf16.mxu0 0
      %2686 = vmatpush1.bf16.msra.mxu0 0
      %2687 = vmatprep.subr.bf16.mxu0 0
      %2688 = vmatpush1.bf16.msra.mxu0 0
      %2689 = vmatprep.subr.bf16.mxu0 0
      %2690 = vmatpush1.bf16.msra.mxu0 0
      %2691 = vmatprep.subr.bf16.mxu0 0
      %2692 = vmatpush1.bf16.msra.mxu0 0
      %2693 = vmatprep.subr.bf16.mxu0 0
      %2694 = vmatpush1.bf16.msra.mxu0 0
      %2695 = vmatprep.subr.bf16.mxu0 0
      %2696 = vmatpush1.bf16.msra.mxu0 0
      %2697 = vmatprep.subr.bf16.mxu0 0
      %2698 = vmatpush1.bf16.msra.mxu0 0
      %2699 = vmatprep.subr.bf16.mxu0 0
      %2700 = vmatpush1.bf16.msra.mxu0 0
      %2701 = vmatprep.subr.bf16.mxu0 0
      %2702 = vmatpush1.bf16.msra.mxu0 0
      %2703 = vmatprep.subr.bf16.mxu0 0
      %2704 = vmatpush1.bf16.msra.mxu0 0
      %2705 = vmatprep.subr.bf16.mxu0 0
      %2706 = vmatpush1.bf16.msra.mxu0 0
      %2707 = vmatprep.subr.bf16.mxu0 0
      %2708 = vmatpush1.bf16.msra.mxu0 0
      %2709 = vmatprep.mubr.bf16.mxu0 0
      %2710 = vmatmul.mubr.bf16.gmra.mrb[0].mxu0 %v2654
      %v2711 = vpop.f32.mrb[0].mxu0
      %v2712 = vadd.f32 0.0, %v2711
      %v2713 = vpop.f32.mrb[0].mxu0
      %v2714 = vpop.f32.mrb[0].mxu0
      %v2715 = vadd.f32 0.0, %v2714
      %v2716 = vpop.f32.mrb[0].mxu0
      %2717 = vmatprep.mubr.bf16.mxu0 0
      %2718 = vmatmul.mubr.bf16.gmra.mrb[0].mxu0 %v2657
      %v2719 = vpop.f32.mrb[0].mxu0
      %v2720 = vadd.f32 0.0, %v2719
      %v2721 = vpop.f32.mrb[0].mxu0
      %v2722 = vpop.f32.mrb[0].mxu0
      %v2723 = vadd.f32 0.0, %v2722
      %v2724 = vpop.f32.mrb[0].mxu0
      %2725 = vmatprep.mubr.bf16.mxu0 0
      %2726 = vmatmul.mubr.bf16.gmra.mrb[0].mxu0 %v2660
      %v2727 = vpop.f32.mrb[0].mxu0
      %v2728 = vadd.f32 0.0, %v2727
      %v2729 = vpop.f32.mrb[0].mxu0
      %v2730 = vpop.f32.mrb[0].mxu0
      %v2731 = vadd.f32 0.0, %v2730
      %v2732 = vpop.f32.mrb[0].mxu0
      %2733 = vmatprep.mubr.bf16.mxu0 0
      %2734 = vmatmul.mubr.bf16.gmra.mrb[0].mxu0 %v2663
      %v2735 = vpop.f32.mrb[0].mxu0
      %v2736 = vadd.f32 0.0, %v2735
      %v2737 = vpop.f32.mrb[0].mxu0
      %v2738 = vpop.f32.mrb[0].mxu0
      %v2739 = vadd.f32 0.0, %v2738
      %v2740 = vpop.f32.mrb[0].mxu0
      %2741 = vmatprep.mubr.bf16.mxu0 0
      %2742 = vmatmul.mubr.bf16.gmra.mrb[0].mxu0 %v2666
      %v2743 = vpop.f32.mrb[0].mxu0
      %v2744 = vadd.f32 0.0, %v2743
      %v2745 = vpop.f32.mrb[0].mxu0
      %v2746 = vpop.f32.mrb[0].mxu0
      %v2747 = vadd.f32 0.0, %v2746
      %v2748 = vpop.f32.mrb[0].mxu0
      %2749 = vmatprep.mubr.bf16.mxu0 0
      %2750 = vmatmul.mubr.bf16.gmra.mrb[0].mxu0 %v2669
      %v2751 = vpop.f32.mrb[0].mxu0
      %v2752 = vadd.f32 0.0, %v2751
      %v2753 = vpop.f32.mrb[0].mxu0
      %v2754 = vpop.f32.mrb[0].mxu0
      %v2755 = vadd.f32 0.0, %v2754
      %v2756 = vpop.f32.mrb[0].mxu0
      %2757 = vmatprep.mubr.bf16.mxu0 0
      %2758 = vmatmul.mubr.bf16.gmra.mrb[0].mxu0 %v2672
      %v2759 = vpop.f32.mrb[0].mxu0
      %v2760 = vadd.f32 0.0, %v2759
      %v2761 = vpop.f32.mrb[0].mxu0
      %v2762 = vpop.f32.mrb[0].mxu0
      %v2763 = vadd.f32 0.0, %v2762
      %v2764 = vpop.f32.mrb[0].mxu0
      %2765 = vmatprep.mubr.bf16.mxu0 0
      %2766 = vmatmul.mubr.bf16.gmra.mrb[0].mxu0 %v2675
      %v2767 = vpop.f32.mrb[0].mxu0
      %v2768 = vadd.f32 0.0, %v2767
      %v2769 = vpop.f32.mrb[0].mxu0
      %v2770 = vpop.f32.mrb[0].mxu0
      %v2771 = vadd.f32 0.0, %v2770
      %v2772 = vpop.f32.mrb[0].mxu0
      %2773 = vdwg.mxu0
      %v2774 = vadd.f32 %v2578, %v2712
      %v2775 = vadd.f32 %v2579, %v2715
      %v2776 = vadd.f32 %v2580, %v2720
      %v2777 = vadd.f32 %v2581, %v2723
      %v2778 = vadd.f32 %v2582, %v2728
      %v2779 = vadd.f32 %v2583, %v2731
      %v2780 = vadd.f32 %v2584, %v2736
      %v2781 = vadd.f32 %v2585, %v2739
      %v2782 = vadd.f32 %v2586, %v2744
      %v2783 = vadd.f32 %v2587, %v2747
      %v2784 = vadd.f32 %v2588, %v2752
      %v2785 = vadd.f32 %v2589, %v2755
      %v2786 = vadd.f32 %v2590, %v2760
      %v2787 = vadd.f32 %v2591, %v2763
      %v2788 = vadd.f32 %v2592, %v2768
      %v2789 = vadd.f32 %v2593, %v2771
      %v2790 = vld [vmem:[%s1 + $0x100] sm:$0xff]
      %v2791 = vld [vmem:[%s1 + $0x108] sm:$0xff]
      %v2792 = vld [vmem:[%s1 + $0x110] sm:$0xff]
      %v2793 = vld [vmem:[%s1 + $0x118] sm:$0xff]
      %v2794 = vld [vmem:[%s1 + $0x120] sm:$0xff]
      %v2795 = vld [vmem:[%s1 + $0x128] sm:$0xff]
      %v2796 = vld [vmem:[%s1 + $0x130] sm:$0xff]
      %v2797 = vld [vmem:[%s1 + $0x138] sm:$0xff]
      %v2798 = vld [vmem:[%s1 + $0x140] sm:$0xff]
      %v2799 = vld [vmem:[%s1 + $0x148] sm:$0xff]
      %v2800 = vld [vmem:[%s1 + $0x150] sm:$0xff]
      %v2801 = vld [vmem:[%s1 + $0x158] sm:$0xff]
      %v2802 = vld [vmem:[%s1 + $0x160] sm:$0xff]
      %v2803 = vld [vmem:[%s1 + $0x168] sm:$0xff]
      %v2804 = vld [vmem:[%s1 + $0x170] sm:$0xff]
      %v2805 = vld [vmem:[%s1 + $0x178] sm:$0xff]
      %2807 = vset.pattern.permute.xlu0 0
      %2808 = vperm.xlu0 %2807, %v2790
      %v2809 = vpop.permute.xlu0 %2808
      %2812 = vset.pattern.permute.xlu0 0
      %2813 = vperm.xlu0 %2812, %v2791
      %v2814 = vpop.permute.xlu0 %2813
      %2817 = vset.pattern.permute.xlu0 0
      %2818 = vperm.xlu0 %2817, %v2792
      %v2819 = vpop.permute.xlu0 %2818
      %2822 = vset.pattern.permute.xlu0 0
      %2823 = vperm.xlu0 %2822, %v2793
      %v2824 = vpop.permute.xlu0 %2823
      %2827 = vset.pattern.permute.xlu0 0
      %2828 = vperm.xlu0 %2827, %v2794
      %v2829 = vpop.permute.xlu0 %2828
      %2832 = vset.pattern.permute.xlu0 0
      %2833 = vperm.xlu0 %2832, %v2795
      %v2834 = vpop.permute.xlu0 %2833
      %2837 = vset.pattern.permute.xlu0 0
      %2838 = vperm.xlu0 %2837, %v2796
      %v2839 = vpop.permute.xlu0 %2838
      %2842 = vset.pattern.permute.xlu0 0
      %2843 = vperm.xlu0 %2842, %v2797
      %v2844 = vpop.permute.xlu0 %2843
      %2847 = vset.pattern.permute.xlu0 0
      %2848 = vperm.xlu0 %2847, %v2798
      %v2849 = vpop.permute.xlu0 %2848
      %2852 = vset.pattern.permute.xlu0 0
      %2853 = vperm.xlu0 %2852, %v2799
      %v2854 = vpop.permute.xlu0 %2853
      %2857 = vset.pattern.permute.xlu0 0
      %2858 = vperm.xlu0 %2857, %v2800
      %v2859 = vpop.permute.xlu0 %2858
      %2862 = vset.pattern.permute.xlu0 0
      %2863 = vperm.xlu0 %2862, %v2801
      %v2864 = vpop.permute.xlu0 %2863
      %2867 = vset.pattern.permute.xlu0 0
      %2868 = vperm.xlu0 %2867, %v2802
      %v2869 = vpop.permute.xlu0 %2868
      %2872 = vset.pattern.permute.xlu0 0
      %2873 = vperm.xlu0 %2872, %v2803
      %v2874 = vpop.permute.xlu0 %2873
      %2877 = vset.pattern.permute.xlu0 0
      %2878 = vperm.xlu0 %2877, %v2804
      %v2879 = vpop.permute.xlu0 %2878
      %2882 = vset.pattern.permute.xlu0 0
      %2883 = vperm.xlu0 %2882, %v2805
      %v2884 = vpop.permute.xlu0 %2883
      %v2886 = vmul.f32 %v2774, %v2809
      %v2887 = vmul.f32 %v2775, %v2814
      %v2888 = vmul.f32 %v2776, %v2819
      %v2889 = vmul.f32 %v2777, %v2824
      %v2890 = vmul.f32 %v2778, %v2829
      %v2891 = vmul.f32 %v2779, %v2834
      %v2892 = vmul.f32 %v2780, %v2839
      %v2893 = vmul.f32 %v2781, %v2844
      %v2894 = vmul.f32 %v2782, %v2849
      %v2895 = vmul.f32 %v2783, %v2854
      %v2896 = vmul.f32 %v2784, %v2859
      %v2897 = vmul.f32 %v2785, %v2864
      %v2898 = vmul.f32 %v2786, %v2869
      %v2899 = vmul.f32 %v2787, %v2874
      %v2900 = vmul.f32 %v2788, %v2879
      %v2901 = vmul.f32 %v2789, %v2884
      %2902 = vst.msk [vmem:[%s197 + $0x100] sm:$0xff] %vm510, %v2886
      %2903 = vst.msk [vmem:[%s197 + $0x108] sm:$0xff] %vm510, %v2887
      %2904 = vst.msk [vmem:[%s197 + $0x110] sm:$0xff] %vm510, %v2888
      %2905 = vst.msk [vmem:[%s197 + $0x118] sm:$0xff] %vm510, %v2889
      %2906 = vst.msk [vmem:[%s197 + $0x120] sm:$0xff] %vm510, %v2890
      %2907 = vst.msk [vmem:[%s197 + $0x128] sm:$0xff] %vm510, %v2891
      %2908 = vst.msk [vmem:[%s197 + $0x130] sm:$0xff] %vm510, %v2892
      %2909 = vst.msk [vmem:[%s197 + $0x138] sm:$0xff] %vm510, %v2893
      %2910 = vst.msk [vmem:[%s197 + $0x140] sm:$0xff] %vm510, %v2894
      %2911 = vst.msk [vmem:[%s197 + $0x148] sm:$0xff] %vm510, %v2895
      %2912 = vst.msk [vmem:[%s197 + $0x150] sm:$0xff] %vm510, %v2896
      %2913 = vst.msk [vmem:[%s197 + $0x158] sm:$0xff] %vm510, %v2897
      %2914 = vst.msk [vmem:[%s197 + $0x160] sm:$0xff] %vm510, %v2898
      %2915 = vst.msk [vmem:[%s197 + $0x168] sm:$0xff] %vm510, %v2899
      %2916 = vst.msk [vmem:[%s197 + $0x170] sm:$0xff] %vm510, %v2900
      %2917 = vst.msk [vmem:[%s197 + $0x178] sm:$0xff] %vm510, %v2901
      %p2918 = scmp.lt.s32.totalorder %s15, 1
      %s2919 = scalar_select %p2918, %s15, 1
      %s2920 = smul.addr %s2919, 48
      %s2921 = smul.addr %s2920, 8
      %s2922 = scalar_lea.vmem %s4, %s2921
      // Predicated region
      $region37: #{tpu_custom_call.1} parent=35 // pred_check
        %p2923 = pneg %p122
      $region38: #{tpu_custom_call.1} parent=35 // pred_check_branch
        %2925 = sbr.rel (%p2923) target = $region40
      $region39: #{tpu_custom_call.1} parent=35 // pred_region
        _
      $region40: #{tpu_custom_call.1} parent=35 // pred_fallthru
        _
    $region36: #{tpu_custom_call.1} parent=5 // pred_fallthru
      _
    %p2926 = scmp.le.s32.totalorder 2, %s10
    // Predicated region
    $region41: #{tpu_custom_call.1} parent=5 // pred_check
      %p2927 = pneg %p2926
    $region42: #{tpu_custom_call.1} parent=5 // pred_check_branch
      %2929 = sbr.rel (%p2927) target = $region44
    $region43: #{tpu_custom_call.1} parent=5 // pred_region
      %s2930 = ssub.s32 %s10, 2
      // Predicated region
      $region45: #{tpu_custom_call.1} parent=43 // pred_check
        %p2931 = pneg %p128
      $region46: #{tpu_custom_call.1} parent=43 // pred_check_branch
        %2933 = sbr.rel (%p2931) target = $region48
      $region47: #{tpu_custom_call.1} parent=43 // pred_region
        %p2934 = scmp.lt.s32.totalorder %s16, 1
        %s2935 = scalar_select %p2934, %s16, 1
        %s2936 = smul.addr %s2935, 48
        %s2937 = smul.addr %s2936, 8
        %s2938 = scalar_lea.vmem %s4, %s2937
      $region48: #{tpu_custom_call.1} parent=43 // pred_fallthru
        _
    $region44: #{tpu_custom_call.1} parent=5 // pred_fallthru
      _
  $region6: #{tpu_custom_call.1} parent=0 // loop_footer
    %s14 = sadd.s32 1, %s10
  $region7: #{tpu_custom_call.1} parent=0 // loop_footer_branch
    %9 = sbr.rel target = $region3
  $region8: #{tpu_custom_call.1} parent=0 // loop_exit
    _

</llo_original>
